<compile_context>
chip_gen: v6e
topology: v6e:2x2x1
jax: 0.10.0
libtpu: 0.0.40
codegen_flags: <defaults>
</compile_context>

<pallas_src>
import math
import functools

import jax
import jax.numpy as jnp
from jax import lax
from jax.experimental import pallas as pl
from jax.experimental.pallas import tpu as pltpu


# ----------------------------------------------------------------------------
# Exact (erf-based) GELU, matching nn.GELU()'s default.
# erf via Abramowitz & Stegun 7.1.26 (|err| < 1.5e-7): only mul/add/exp/select,
# so it lowers on the VPU/EUP without relying on a lax.erf lowering rule.
# ----------------------------------------------------------------------------
def _erf(z):
    a1, a2, a3, a4, a5 = (0.254829592, -0.284496736, 1.421413741,
                          -1.453152027, 1.061405429)
    p = 0.3275911
    az = jnp.abs(z)
    t = 1.0 / (1.0 + p * az)
    poly = ((((a5 * t + a4) * t + a3) * t + a2) * t + a1) * t
    e = 1.0 - poly * jnp.exp(-az * az)
    return jnp.where(z < 0, -e, e)


def _gelu_exact(x):
    return 0.5 * x * (1.0 + _erf(x * (1.0 / math.sqrt(2.0))))


# ----------------------------------------------------------------------------
# Pallas kernel
# ----------------------------------------------------------------------------
def _encoder_block_kernel(
    x_ref,                       # (1, T, C)   f32   (whole sequence, this batch)
    ln1w_ref, ln1b_ref,          # (1, C)      f32
    wq_ref, bq_ref,              # (C, C) bf16 (pre-scaled by 1/sqrt(D)), (1, C) f32
    wkv_ref, bkv_ref,            # (C, 2C) bf16, (1, 2C) f32
    wp_ref, bp_ref,              # (C, C) bf16, (1, C) f32
    ln2w_ref, ln2b_ref,          # (1, C)      f32
    w1_ref, b1_ref,              # (C, 4C) bf16, (1, 4C) f32
    w2_ref, b2_ref,              # (4C, C) bf16, (1, C) f32
    o_ref,                       # (1, tq, C)  f32
    kv_scr,                      # (T, 2C)     bf16  (persists across q tiles)
    *, num_heads: int, eps: float = 1e-5,
):
    f32, bf16 = jnp.float32, jnp.bfloat16
    _, T, C = x_ref.shape
    tq = o_ref.shape[1]
    H = num_heads
    D = C // H
    qi = pl.program_id(1)

    def layer_norm(z, w_ref, b_ref):                       # f32 throughout
        mu = jnp.mean(z, axis=-1, keepdims=True)
        var = jnp.mean(jnp.square(z - mu), axis=-1, keepdims=True)
        zn = (z - mu) * lax.rsqrt(var + eps)
        return zn * w_ref[...] + b_ref[...]                # (1, C) broadcasts

    # ---- K/V for the whole sequence: once per batch element ---------------
    @pl.when(qi == 0)
    def _():
        hf = layer_norm(x_ref[0], ln1w_ref, ln1b_ref).astype(bf16)   # (T, C)
        kv = jnp.dot(hf, wkv_ref[...], preferred_element_type=f32)
        kv_scr[...] = (kv + bkv_ref[...]).astype(bf16)               # (T, 2C)

    # ---- current query tile ------------------------------------------------
    start = pl.multiple_of(qi * tq, tq)
    x_t = x_ref[0, pl.ds(start, tq), :]                              # (tq, C) f32

    hq = layer_norm(x_t, ln1w_ref, ln1b_ref).astype(bf16)
    # Wq / bq already carry the 1/sqrt(D) factor (folded in prepare_params).
    q = (jnp.dot(hq, wq_ref[...], preferred_element_type=f32)
         + bq_ref[...]).astype(bf16)                                 # (tq, C)

    # ---- attention: per-head lane slices of the lane-dense q / kv ----------
    y_heads = []
    for h in range(H):                                               # unrolled
        qh = q[:, h * D:(h + 1) * D]                                 # (tq, D) bf16
        kh = kv_scr[:, h * D:(h + 1) * D]                            # (T, D)  bf16
        vh = kv_scr[:, C + h * D:C + (h + 1) * D]                    # (T, D)  bf16
        s = jnp.einsum('qd,kd->qk', qh, kh,
                       preferred_element_type=f32)                   # (tq, T) f32
        s = s - jnp.max(s, axis=-1, keepdims=True)
        p = jnp.exp(s)                                               # unnormalised
        denom = jnp.sum(p, axis=-1, keepdims=True)                   # (tq, 1)
        yh = jnp.dot(p.astype(bf16), vh, preferred_element_type=f32)
        # Normalise after the PV matmul: (tq, D) multiplies instead of (tq, T).
        yh = yh * pl.reciprocal(denom, approx=True)
        y_heads.append(yh.astype(bf16))
    # Head merge on the lane axis == torch's rearrange 'b h t e -> b t (h e)'.
    y = jnp.concatenate(y_heads, axis=-1)                            # (tq, C) bf16

    # Output projection: one (tq,C)@(C,C) MXU matmul (head reduction happens in
    # the MXU accumulator, not as per-head VPU adds).
    attn = jnp.dot(y, wp_ref[...], preferred_element_type=f32) + bp_ref[...]

    x1 = x_t + attn                                                  # residual 1

    # ---- MLP branch ---------------------------------------------------------
    h2 = layer_norm(x1, ln2w_ref, ln2b_ref).astype(bf16)
    m = jnp.dot(h2, w1_ref[...], preferred_element_type=f32) + b1_ref[...]
    m = _gelu_exact(m)                         # exact GELU, like nn.GELU()
    m = jnp.dot(m.astype(bf16), w2_ref[...],
                preferred_element_type=f32) + b2_ref[...]

    o_ref[0] = x1 + m                                                # residual 2


# ----------------------------------------------------------------------------
# One-time weight preparation (hoisted out of the per-call path)
# ----------------------------------------------------------------------------
def prepare_params(params, num_heads):
    """Fuse K/V weights, fold 1/sqrt(D) into Q, cast matmul weights to bf16."""
    C = params["wq"].shape[0]
    D = C // num_heads
    scale = 1.0 / math.sqrt(D)
    f32, bf16 = jnp.float32, jnp.bfloat16
    wkv = jnp.concatenate([params["wk"], params["wv"]], axis=1)      # (C, 2C)
    bkv = jnp.concatenate([params["bk"], params["bv"]], axis=1)      # (1, 2C)
    return (
        params["ln1_w"].astype(f32), params["ln1_b"].astype(f32),
        (params["wq"] * scale).astype(bf16), (params["bq"] * scale).astype(f32),
        wkv.astype(bf16), bkv.astype(f32),
        params["wp"].astype(bf16), params["bp"].astype(f32),
        params["ln2_w"].astype(f32), params["ln2_b"].astype(f32),
        params["w1"].astype(bf16), params["b1"].astype(f32),
        params["w2"].astype(bf16), params["b2"].astype(f32),
    )


# ----------------------------------------------------------------------------
# Wrapper
# ----------------------------------------------------------------------------
def encoder_block(x, prepared, num_heads):
    """x: (B, T, C) float32.  prepared: output of prepare_params()."""
    x = x.astype(jnp.float32)
    B, T, C = x.shape

    # Query-token tile: >=256 keeps the 2x256x256 MXU on v6e/v7x busy; smaller
    # tiles are still fine for v5e's 4x128x128.  Falls back to the whole
    # sequence if nothing divides T.
    tq = next((s for s in (256, 128, 64, 32, 16, 8) if T % s == 0), T)
    n_q = T // tq

    def whole(a):
        # Constant index map: same block every grid step, so the weights are
        # fetched once and never re-DMA'd across (batch, tile) iterations.
        return pl.BlockSpec(a.shape, lambda b, t: (0,) * a.ndim)

    in_specs = [pl.BlockSpec((1, T, C), lambda b, t: (b, 0, 0))] + [
        whole(w) for w in prepared
    ]
    out_spec = pl.BlockSpec((1, tq, C), lambda b, t: (b, t, 0))

    # VMEM budget: ~78% of the physical capacity of whatever generation we run
    # on (headroom for compiler scratch + I/O double buffers), not a flat cap.
    try:
        phys_vmem = int(getattr(pltpu.get_tpu_info(), "vmem_capacity_bytes", 0))
    except Exception:
        phys_vmem = 0
    if not phys_vmem:
        phys_vmem = 64 * 1024 * 1024          # conservative fallback (v7x/TC)
    vmem_limit = int(0.78 * phys_vmem)

    kernel = functools.partial(_encoder_block_kernel, num_heads=num_heads)

    return pl.pallas_call(
        kernel,
        out_shape=jax.ShapeDtypeStruct((B, T, C), jnp.float32),
        grid_spec=pltpu.PrefetchScalarGridSpec(
            num_scalar_prefetch=0,
            grid=(B, n_q),
            in_specs=in_specs,
            out_specs=out_spec,
            # Lane-dense (T, 2C) K/V of the current batch element; persists
            # across the token axis, rebuilt when the batch index changes.
            scratch_shapes=[pltpu.VMEM((T, 2 * C), jnp.bfloat16)],
        ),
        compiler_params=pltpu.CompilerParams(
            # Batch axis is megacore-parallel; the token axis carries the K/V
            # scratch dependency so it must stay "arbitrary".
            dimension_semantics=("parallel", "arbitrary"),
            vmem_limit_bytes=vmem_limit,
        ),
    )(x, *prepared)


# ----------------------------------------------------------------------------
# Deterministic parameter init (shapes match nn.Linear / nn.LayerNorm)
# ----------------------------------------------------------------------------
def init_params(key, embed_dim):
    C = embed_dim
    ks = jax.random.split(key, 10)

    def lin(k, fan_in, fan_out):
        # weight stored as (in, out) so the model computes x @ W + b
        return jax.random.normal(k, (fan_in, fan_out), jnp.float32) * (
            1.0 / math.sqrt(fan_in))

    return {
        "ln1_w": jnp.ones((1, C), jnp.float32),
        "ln1_b": jnp.zeros((1, C), jnp.float32),
        "ln2_w": jnp.ones((1, C), jnp.float32),
        "ln2_b": jnp.zeros((1, C), jnp.float32),
        "wq": lin(ks[0], C, C), "bq": jnp.zeros((1, C), jnp.float32),
        "wk": lin(ks[1], C, C), "bk": jnp.zeros((1, C), jnp.float32),
        "wv": lin(ks[2], C, C), "bv": jnp.zeros((1, C), jnp.float32),
        "wp": lin(ks[3], C, C), "bp": jnp.zeros((1, C), jnp.float32),
        "w1": lin(ks[4], C, 4 * C), "b1": jnp.zeros((1, 4 * C), jnp.float32),
        "w2": lin(ks[5], 4 * C, C), "b2": jnp.zeros((1, C), jnp.float32),
    }


# ----------------------------------------------------------------------------
# Pure-JAX reference (mirrors the PyTorch forward, dropout = identity)
# ----------------------------------------------------------------------------
def encoder_block_ref(x, p, num_heads, eps=1e-5):
    B, T, C = x.shape
    D = C // num_heads

    def ln(z, w, b):
        mu = jnp.mean(z, axis=-1, keepdims=True)
        var = jnp.mean(jnp.square(z - mu), axis=-1, keepdims=True)
        return (z - mu) * lax.rsqrt(var + eps) * w + b

    h = ln(x, p["ln1_w"], p["ln1_b"])
    q = h @ p["wq"] + p["bq"]
    k = h @ p["wk"] + p["bk"]
    v = h @ p["wv"] + p["bv"]
    q = q.reshape(B, T, num_heads, D).transpose(0, 2, 1, 3)
    k = k.reshape(B, T, num_heads, D).transpose(0, 2, 1, 3)
    v = v.reshape(B, T, num_heads, D).transpose(0, 2, 1, 3)
    att = (q @ jnp.swapaxes(k, -2, -1)) / math.sqrt(D)
    att = jax.nn.softmax(att, axis=-1)
    y = att @ v
    y = y.transpose(0, 2, 1, 3).reshape(B, T, C)
    y = y @ p["wp"] + p["bp"]
    x1 = x + y
    h2 = ln(x1, p["ln2_w"], p["ln2_b"])
    m = jax.nn.gelu(h2 @ p["w1"] + p["b1"], approximate=False)
    m = m @ p["w2"] + p["b2"]
    return x1 + m


# ----------------------------------------------------------------------------
if __name__ == "__main__":
    B, T, C, H = 2, 8, 32, 4   # batch, tokens, embed_dim, num_heads

    key = jax.random.PRNGKey(0)
    kx, kp = jax.random.split(key)
    x = jax.random.normal(kx, (B, T, C), jnp.float32)
    params = init_params(kp, C)

    prepared = prepare_params(params, num_heads=H)   # one-time weight prep
    out = encoder_block(x, prepared, num_heads=H)
    out = jax.block_until_ready(out)

    # Reference with bf16-rounded matmul weights (the kernel's MXU operand
    # dtype) so the comparison isolates kernel correctness from bf16 weight
    # quantisation.  (Activations are also rounded to bf16 at the MXU inside
    # the kernel; the 5e-2 tolerance covers that plus the approx reciprocal.)
    qparams = dict(params)
    for name in ("wq", "wk", "wv", "wp", "w1", "w2"):
        qparams[name] = params[name].astype(jnp.bfloat16).astype(jnp.float32)
    ref = encoder_block_ref(x, qparams, num_heads=H)

    assert out.shape == (B, T, C)
    err = jnp.max(jnp.abs(out - ref))
    assert jnp.allclose(out, ref, atol=5e-2, rtol=5e-2), f"max abs err = {err}"
    print("KERNEL_OK")
</pallas_src>

<mosaic_0001>
module attributes {stable_mosaic.version = 11 : i64} {
  func.func @_encoder_block_kernel(%arg0: i32, %arg1: i32, %arg2: memref<1x8x32xf32, #tpu.memory_space<vmem>>, %arg3: memref<1x32xf32, #tpu.memory_space<vmem>>, %arg4: memref<1x32xf32, #tpu.memory_space<vmem>>, %arg5: memref<32x32xbf16, #tpu.memory_space<vmem>>, %arg6: memref<1x32xf32, #tpu.memory_space<vmem>>, %arg7: memref<32x64xbf16, #tpu.memory_space<vmem>>, %arg8: memref<1x64xf32, #tpu.memory_space<vmem>>, %arg9: memref<32x32xbf16, #tpu.memory_space<vmem>>, %arg10: memref<1x32xf32, #tpu.memory_space<vmem>>, %arg11: memref<1x32xf32, #tpu.memory_space<vmem>>, %arg12: memref<1x32xf32, #tpu.memory_space<vmem>>, %arg13: memref<32x128xbf16, #tpu.memory_space<vmem>>, %arg14: memref<1x128xf32, #tpu.memory_space<vmem>>, %arg15: memref<128x32xbf16, #tpu.memory_space<vmem>>, %arg16: memref<1x32xf32, #tpu.memory_space<vmem>>, %arg17: memref<1x8x32xf32, #tpu.memory_space<vmem>>, %arg18: memref<8x64xbf16, #tpu.memory_space<vmem>>) attributes {dimension_semantics = [#tpu.dimension_semantics<parallel>, #tpu.dimension_semantics<arbitrary>], iteration_bounds = array<i64: 2, 1>, scalar_prefetch = 0 : i64, scratch_operands = 1 : i64, tpu.core_type = #tpu.core_type<tc>, window_params = [{transform_indices = @transform_0, window_bounds = array<i64: 1, 8, 32>}, {pipeline_mode = #tpu.pipeline_mode<synchronous>, transform_indices = @transform_1, window_bounds = array<i64: 1, 32>}, {pipeline_mode = #tpu.pipeline_mode<synchronous>, transform_indices = @transform_2, window_bounds = array<i64: 1, 32>}, {pipeline_mode = #tpu.pipeline_mode<synchronous>, transform_indices = @transform_3, window_bounds = array<i64: 32, 32>}, {pipeline_mode = #tpu.pipeline_mode<synchronous>, transform_indices = @transform_4, window_bounds = array<i64: 1, 32>}, {pipeline_mode = #tpu.pipeline_mode<synchronous>, transform_indices = @transform_5, window_bounds = array<i64: 32, 64>}, {pipeline_mode = #tpu.pipeline_mode<synchronous>, transform_indices = @transform_6, window_bounds = array<i64: 1, 64>}, {pipeline_mode = #tpu.pipeline_mode<synchronous>, transform_indices = @transform_7, window_bounds = array<i64: 32, 32>}, {pipeline_mode = #tpu.pipeline_mode<synchronous>, transform_indices = @transform_8, window_bounds = array<i64: 1, 32>}, {pipeline_mode = #tpu.pipeline_mode<synchronous>, transform_indices = @transform_9, window_bounds = array<i64: 1, 32>}, {pipeline_mode = #tpu.pipeline_mode<synchronous>, transform_indices = @transform_10, window_bounds = array<i64: 1, 32>}, {pipeline_mode = #tpu.pipeline_mode<synchronous>, transform_indices = @transform_11, window_bounds = array<i64: 32, 128>}, {pipeline_mode = #tpu.pipeline_mode<synchronous>, transform_indices = @transform_12, window_bounds = array<i64: 1, 128>}, {pipeline_mode = #tpu.pipeline_mode<synchronous>, transform_indices = @transform_13, window_bounds = array<i64: 128, 32>}, {pipeline_mode = #tpu.pipeline_mode<synchronous>, transform_indices = @transform_14, window_bounds = array<i64: 1, 32>}, {transform_indices = @transform_15, window_bounds = array<i64: 1, 8, 32>}]} {
    %c0_i32 = arith.constant 0 : i32
    %0 = arith.cmpi eq, %arg1, %c0_i32 : i32
    %1 = arith.extui %0 : i1 to i32
    %c0_i32_0 = arith.constant 0 : i32
    %2 = arith.cmpi ne, %1, %c0_i32_0 : i32
    scf.if %2 {
      %c0_82 = arith.constant 0 : index
      %c0_83 = arith.constant 0 : index
      %c0_84 = arith.constant 0 : index
      %194 = vector.load %arg2[%c0_82, %c0_83, %c0_84] : memref<1x8x32xf32, #tpu.memory_space<vmem>>, vector<1x8x32xf32>
      %195 = vector.shape_cast %194 : vector<1x8x32xf32> to vector<8x32xf32>
      %cst_85 = arith.constant dense<0.000000e+00> : vector<8xf32>
      %196 = vector.multi_reduction <add>, %195, %cst_85 [1] : vector<8x32xf32> to vector<8xf32>
      %197 = vector.shape_cast %196 : vector<8xf32> to vector<8x1xf32>
      %cst_86 = arith.constant 3.200000e+01 : f32
      %198 = vector.broadcast %cst_86 : f32 to vector<8x1xf32>
      %199 = arith.divf %197, %198 : vector<8x1xf32>
      %200 = vector.broadcast %199 : vector<8x1xf32> to vector<8x32xf32>
      %201 = arith.subf %195, %200 : vector<8x32xf32>
      %202 = arith.mulf %201, %201 : vector<8x32xf32>
      %cst_87 = arith.constant dense<0.000000e+00> : vector<8xf32>
      %203 = vector.multi_reduction <add>, %202, %cst_87 [1] : vector<8x32xf32> to vector<8xf32>
      %204 = vector.shape_cast %203 : vector<8xf32> to vector<8x1xf32>
      %cst_88 = arith.constant 3.200000e+01 : f32
      %205 = vector.broadcast %cst_88 : f32 to vector<8x1xf32>
      %206 = arith.divf %204, %205 : vector<8x1xf32>
      %207 = vector.broadcast %199 : vector<8x1xf32> to vector<8x32xf32>
      %208 = arith.subf %195, %207 : vector<8x32xf32>
      %cst_89 = arith.constant 9.99999974E-6 : f32
      %209 = vector.broadcast %cst_89 : f32 to vector<8x1xf32>
      %210 = arith.addf %206, %209 : vector<8x1xf32>
      %211 = math.rsqrt %210 : vector<8x1xf32>
      %212 = vector.broadcast %211 : vector<8x1xf32> to vector<8x32xf32>
      %213 = arith.mulf %208, %212 : vector<8x32xf32>
      %c0_90 = arith.constant 0 : index
      %c0_91 = arith.constant 0 : index
      %214 = vector.load %arg3[%c0_90, %c0_91] : memref<1x32xf32, #tpu.memory_space<vmem>>, vector<1x32xf32>
      %215 = vector.broadcast %214 : vector<1x32xf32> to vector<8x32xf32>
      %216 = arith.mulf %213, %215 : vector<8x32xf32>
      %c0_92 = arith.constant 0 : index
      %c0_93 = arith.constant 0 : index
      %217 = vector.load %arg4[%c0_92, %c0_93] : memref<1x32xf32, #tpu.memory_space<vmem>>, vector<1x32xf32>
      %218 = vector.broadcast %217 : vector<1x32xf32> to vector<8x32xf32>
      %219 = arith.addf %216, %218 : vector<8x32xf32>
      %220 = arith.truncf %219 : vector<8x32xf32> to vector<8x32xbf16>
      %c0_94 = arith.constant 0 : index
      %c0_95 = arith.constant 0 : index
      %221 = vector.load %arg7[%c0_94, %c0_95] : memref<32x64xbf16, #tpu.memory_space<vmem>>, vector<32x64xbf16>
      %cst_96 = arith.constant dense<0.000000e+00> : vector<8x64xf32>
      %222 = tpu.matmul %220, %221, %cst_96 {dimension_numbers = #tpu.dot_dimension_numbers<[1], [0], [0], [1], [0, 0, 1, 1], [], []>} : vector<8x32xbf16>, vector<32x64xbf16>, vector<8x64xf32> -> vector<8x64xf32>
      %c0_97 = arith.constant 0 : index
      %c0_98 = arith.constant 0 : index
      %223 = vector.load %arg8[%c0_97, %c0_98] : memref<1x64xf32, #tpu.memory_space<vmem>>, vector<1x64xf32>
      %224 = vector.broadcast %223 : vector<1x64xf32> to vector<8x64xf32>
      %225 = arith.addf %222, %224 : vector<8x64xf32>
      %226 = arith.truncf %225 : vector<8x64xf32> to vector<8x64xbf16>
      %c0_99 = arith.constant 0 : index
      %c0_100 = arith.constant 0 : index
      %227 = vector.load %arg18[%c0_99, %c0_100] : memref<8x64xbf16, #tpu.memory_space<vmem>>, vector<8x64xbf16>
      tpu.vector_store %arg18[%c0_99, %c0_100], %226 {strides = array<i32>} : memref<8x64xbf16, #tpu.memory_space<vmem>>, vector<8x64xbf16>,
    } else {
    }
    %c8_i32 = arith.constant 8 : i32
    %3 = arith.muli %arg1, %c8_i32 : i32
    %4 = tpu.assume_multiple %3, 8 : i32
    %c0 = arith.constant 0 : index
    %5 = arith.index_cast %4 : i32 to index
    %c0_1 = arith.constant 0 : index
    %6 = vector.load %arg2[%c0, %5, %c0_1] : memref<1x8x32xf32, #tpu.memory_space<vmem>>, vector<1x8x32xf32>
    %7 = vector.shape_cast %6 : vector<1x8x32xf32> to vector<8x32xf32>
    %cst = arith.constant dense<0.000000e+00> : vector<8xf32>
    %8 = vector.multi_reduction <add>, %7, %cst [1] : vector<8x32xf32> to vector<8xf32>
    %9 = vector.shape_cast %8 : vector<8xf32> to vector<8x1xf32>
    %cst_2 = arith.constant 3.200000e+01 : f32
    %10 = vector.broadcast %cst_2 : f32 to vector<8x1xf32>
    %11 = arith.divf %9, %10 : vector<8x1xf32>
    %12 = vector.broadcast %11 : vector<8x1xf32> to vector<8x32xf32>
    %13 = arith.subf %7, %12 : vector<8x32xf32>
    %14 = arith.mulf %13, %13 : vector<8x32xf32>
    %cst_3 = arith.constant dense<0.000000e+00> : vector<8xf32>
    %15 = vector.multi_reduction <add>, %14, %cst_3 [1] : vector<8x32xf32> to vector<8xf32>
    %16 = vector.shape_cast %15 : vector<8xf32> to vector<8x1xf32>
    %cst_4 = arith.constant 3.200000e+01 : f32
    %17 = vector.broadcast %cst_4 : f32 to vector<8x1xf32>
    %18 = arith.divf %16, %17 : vector<8x1xf32>
    %19 = vector.broadcast %11 : vector<8x1xf32> to vector<8x32xf32>
    %20 = arith.subf %7, %19 : vector<8x32xf32>
    %cst_5 = arith.constant 9.99999974E-6 : f32
    %21 = vector.broadcast %cst_5 : f32 to vector<8x1xf32>
    %22 = arith.addf %18, %21 : vector<8x1xf32>
    %23 = math.rsqrt %22 : vector<8x1xf32>
    %24 = vector.broadcast %23 : vector<8x1xf32> to vector<8x32xf32>
    %25 = arith.mulf %20, %24 : vector<8x32xf32>
    %c0_6 = arith.constant 0 : index
    %c0_7 = arith.constant 0 : index
    %26 = vector.load %arg3[%c0_6, %c0_7] : memref<1x32xf32, #tpu.memory_space<vmem>>, vector<1x32xf32>
    %27 = vector.broadcast %26 : vector<1x32xf32> to vector<8x32xf32>
    %28 = arith.mulf %25, %27 : vector<8x32xf32>
    %c0_8 = arith.constant 0 : index
    %c0_9 = arith.constant 0 : index
    %29 = vector.load %arg4[%c0_8, %c0_9] : memref<1x32xf32, #tpu.memory_space<vmem>>, vector<1x32xf32>
    %30 = vector.broadcast %29 : vector<1x32xf32> to vector<8x32xf32>
    %31 = arith.addf %28, %30 : vector<8x32xf32>
    %32 = arith.truncf %31 : vector<8x32xf32> to vector<8x32xbf16>
    %c0_10 = arith.constant 0 : index
    %c0_11 = arith.constant 0 : index
    %33 = vector.load %arg5[%c0_10, %c0_11] : memref<32x32xbf16, #tpu.memory_space<vmem>>, vector<32x32xbf16>
    %cst_12 = arith.constant dense<0.000000e+00> : vector<8x32xf32>
    %34 = tpu.matmul %32, %33, %cst_12 {dimension_numbers = #tpu.dot_dimension_numbers<[1], [0], [0], [1], [0, 0, 1, 1], [], []>} : vector<8x32xbf16>, vector<32x32xbf16>, vector<8x32xf32> -> vector<8x32xf32>
    %c0_13 = arith.constant 0 : index
    %c0_14 = arith.constant 0 : index
    %35 = vector.load %arg6[%c0_13, %c0_14] : memref<1x32xf32, #tpu.memory_space<vmem>>, vector<1x32xf32>
    %36 = vector.broadcast %35 : vector<1x32xf32> to vector<8x32xf32>
    %37 = arith.addf %34, %36 : vector<8x32xf32>
    %38 = arith.truncf %37 : vector<8x32xf32> to vector<8x32xbf16>
    %39 = vector.extract_strided_slice %38 {offsets = [0, 0], sizes = [8, 8], strides = [1, 1]} : vector<8x32xbf16> to vector<8x8xbf16>
    %c0_15 = arith.constant 0 : index
    %c0_16 = arith.constant 0 : index
    %40 = vector.load %arg18[%c0_15, %c0_16] : memref<8x64xbf16, #tpu.memory_space<vmem>>, vector<8x8xbf16>
    %c0_17 = arith.constant 0 : index
    %c32 = arith.constant 32 : index
    %41 = vector.load %arg18[%c0_17, %c32] : memref<8x64xbf16, #tpu.memory_space<vmem>>, vector<8x8xbf16>
    "tpu.trace_start"() <{level = 10 : i32, message = "qd,kd->qk"}> : () -> ()
    %cst_18 = arith.constant dense<0.000000e+00> : vector<8x8xf32>
    %42 = tpu.matmul %39, %40, %cst_18 {dimension_numbers = #tpu.dot_dimension_numbers<[1], [1], [0], [0], [0, 0, 1, 0], [], []>} : vector<8x8xbf16>, vector<8x8xbf16>, vector<8x8xf32> -> vector<8x8xf32>
    "tpu.trace_stop"() : () -> ()
    %cst_19 = arith.constant dense<0xFF800000> : vector<8xf32>
    %43 = vector.multi_reduction <maximumf>, %42, %cst_19 [1] : vector<8x8xf32> to vector<8xf32>
    %44 = vector.shape_cast %43 : vector<8xf32> to vector<8x1xf32>
    %45 = vector.broadcast %44 : vector<8x1xf32> to vector<8x8xf32>
    %46 = arith.subf %42, %45 : vector<8x8xf32>
    %47 = math.exp %46 : vector<8x8xf32>
    %cst_20 = arith.constant dense<0.000000e+00> : vector<8xf32>
    %48 = vector.multi_reduction <add>, %47, %cst_20 [1] : vector<8x8xf32> to vector<8xf32>
    %49 = vector.shape_cast %48 : vector<8xf32> to vector<8x1xf32>
    %50 = arith.truncf %47 : vector<8x8xf32> to vector<8x8xbf16>
    %cst_21 = arith.constant dense<0.000000e+00> : vector<8x8xf32>
    %51 = tpu.matmul %50, %41, %cst_21 {dimension_numbers = #tpu.dot_dimension_numbers<[1], [0], [0], [1], [0, 0, 1, 1], [], []>} : vector<8x8xbf16>, vector<8x8xbf16>, vector<8x8xf32> -> vector<8x8xf32>
    %52 = tpu.reciprocal %49 {approx = true} : vector<8x1xf32> -> vector<8x1xf32>
    %53 = vector.broadcast %52 : vector<8x1xf32> to vector<8x8xf32>
    %54 = arith.mulf %51, %53 : vector<8x8xf32>
    %55 = arith.truncf %54 : vector<8x8xf32> to vector<8x8xbf16>
    %56 = vector.extract_strided_slice %38 {offsets = [0, 8], sizes = [8, 8], strides = [1, 1]} : vector<8x32xbf16> to vector<8x8xbf16>
    %c0_22 = arith.constant 0 : index
    %c8 = arith.constant 8 : index
    %57 = vector.load %arg18[%c0_22, %c8] : memref<8x64xbf16, #tpu.memory_space<vmem>>, vector<8x8xbf16>
    %c0_23 = arith.constant 0 : index
    %c40 = arith.constant 40 : index
    %58 = vector.load %arg18[%c0_23, %c40] : memref<8x64xbf16, #tpu.memory_space<vmem>>, vector<8x8xbf16>
    "tpu.trace_start"() <{level = 10 : i32, message = "qd,kd->qk"}> : () -> ()
    %cst_24 = arith.constant dense<0.000000e+00> : vector<8x8xf32>
    %59 = tpu.matmul %56, %57, %cst_24 {dimension_numbers = #tpu.dot_dimension_numbers<[1], [1], [0], [0], [0, 0, 1, 0], [], []>} : vector<8x8xbf16>, vector<8x8xbf16>, vector<8x8xf32> -> vector<8x8xf32>
    "tpu.trace_stop"() : () -> ()
    %cst_25 = arith.constant dense<0xFF800000> : vector<8xf32>
    %60 = vector.multi_reduction <maximumf>, %59, %cst_25 [1] : vector<8x8xf32> to vector<8xf32>
    %61 = vector.shape_cast %60 : vector<8xf32> to vector<8x1xf32>
    %62 = vector.broadcast %61 : vector<8x1xf32> to vector<8x8xf32>
    %63 = arith.subf %59, %62 : vector<8x8xf32>
    %64 = math.exp %63 : vector<8x8xf32>
    %cst_26 = arith.constant dense<0.000000e+00> : vector<8xf32>
    %65 = vector.multi_reduction <add>, %64, %cst_26 [1] : vector<8x8xf32> to vector<8xf32>
    %66 = vector.shape_cast %65 : vector<8xf32> to vector<8x1xf32>
    %67 = arith.truncf %64 : vector<8x8xf32> to vector<8x8xbf16>
    %cst_27 = arith.constant dense<0.000000e+00> : vector<8x8xf32>
    %68 = tpu.matmul %67, %58, %cst_27 {dimension_numbers = #tpu.dot_dimension_numbers<[1], [0], [0], [1], [0, 0, 1, 1], [], []>} : vector<8x8xbf16>, vector<8x8xbf16>, vector<8x8xf32> -> vector<8x8xf32>
    %69 = tpu.reciprocal %66 {approx = true} : vector<8x1xf32> -> vector<8x1xf32>
    %70 = vector.broadcast %69 : vector<8x1xf32> to vector<8x8xf32>
    %71 = arith.mulf %68, %70 : vector<8x8xf32>
    %72 = arith.truncf %71 : vector<8x8xf32> to vector<8x8xbf16>
    %73 = vector.extract_strided_slice %38 {offsets = [0, 16], sizes = [8, 8], strides = [1, 1]} : vector<8x32xbf16> to vector<8x8xbf16>
    %c0_28 = arith.constant 0 : index
    %c16 = arith.constant 16 : index
    %74 = vector.load %arg18[%c0_28, %c16] : memref<8x64xbf16, #tpu.memory_space<vmem>>, vector<8x8xbf16>
    %c0_29 = arith.constant 0 : index
    %c48 = arith.constant 48 : index
    %75 = vector.load %arg18[%c0_29, %c48] : memref<8x64xbf16, #tpu.memory_space<vmem>>, vector<8x8xbf16>
    "tpu.trace_start"() <{level = 10 : i32, message = "qd,kd->qk"}> : () -> ()
    %cst_30 = arith.constant dense<0.000000e+00> : vector<8x8xf32>
    %76 = tpu.matmul %73, %74, %cst_30 {dimension_numbers = #tpu.dot_dimension_numbers<[1], [1], [0], [0], [0, 0, 1, 0], [], []>} : vector<8x8xbf16>, vector<8x8xbf16>, vector<8x8xf32> -> vector<8x8xf32>
    "tpu.trace_stop"() : () -> ()
    %cst_31 = arith.constant dense<0xFF800000> : vector<8xf32>
    %77 = vector.multi_reduction <maximumf>, %76, %cst_31 [1] : vector<8x8xf32> to vector<8xf32>
    %78 = vector.shape_cast %77 : vector<8xf32> to vector<8x1xf32>
    %79 = vector.broadcast %78 : vector<8x1xf32> to vector<8x8xf32>
    %80 = arith.subf %76, %79 : vector<8x8xf32>
    %81 = math.exp %80 : vector<8x8xf32>
    %cst_32 = arith.constant dense<0.000000e+00> : vector<8xf32>
    %82 = vector.multi_reduction <add>, %81, %cst_32 [1] : vector<8x8xf32> to vector<8xf32>
    %83 = vector.shape_cast %82 : vector<8xf32> to vector<8x1xf32>
    %84 = arith.truncf %81 : vector<8x8xf32> to vector<8x8xbf16>
    %cst_33 = arith.constant dense<0.000000e+00> : vector<8x8xf32>
    %85 = tpu.matmul %84, %75, %cst_33 {dimension_numbers = #tpu.dot_dimension_numbers<[1], [0], [0], [1], [0, 0, 1, 1], [], []>} : vector<8x8xbf16>, vector<8x8xbf16>, vector<8x8xf32> -> vector<8x8xf32>
    %86 = tpu.reciprocal %83 {approx = true} : vector<8x1xf32> -> vector<8x1xf32>
    %87 = vector.broadcast %86 : vector<8x1xf32> to vector<8x8xf32>
    %88 = arith.mulf %85, %87 : vector<8x8xf32>
    %89 = arith.truncf %88 : vector<8x8xf32> to vector<8x8xbf16>
    %90 = vector.extract_strided_slice %38 {offsets = [0, 24], sizes = [8, 8], strides = [1, 1]} : vector<8x32xbf16> to vector<8x8xbf16>
    %c0_34 = arith.constant 0 : index
    %c24 = arith.constant 24 : index
    %91 = vector.load %arg18[%c0_34, %c24] : memref<8x64xbf16, #tpu.memory_space<vmem>>, vector<8x8xbf16>
    %c0_35 = arith.constant 0 : index
    %c56 = arith.constant 56 : index
    %92 = vector.load %arg18[%c0_35, %c56] : memref<8x64xbf16, #tpu.memory_space<vmem>>, vector<8x8xbf16>
    "tpu.trace_start"() <{level = 10 : i32, message = "qd,kd->qk"}> : () -> ()
    %cst_36 = arith.constant dense<0.000000e+00> : vector<8x8xf32>
    %93 = tpu.matmul %90, %91, %cst_36 {dimension_numbers = #tpu.dot_dimension_numbers<[1], [1], [0], [0], [0, 0, 1, 0], [], []>} : vector<8x8xbf16>, vector<8x8xbf16>, vector<8x8xf32> -> vector<8x8xf32>
    "tpu.trace_stop"() : () -> ()
    %cst_37 = arith.constant dense<0xFF800000> : vector<8xf32>
    %94 = vector.multi_reduction <maximumf>, %93, %cst_37 [1] : vector<8x8xf32> to vector<8xf32>
    %95 = vector.shape_cast %94 : vector<8xf32> to vector<8x1xf32>
    %96 = vector.broadcast %95 : vector<8x1xf32> to vector<8x8xf32>
    %97 = arith.subf %93, %96 : vector<8x8xf32>
    %98 = math.exp %97 : vector<8x8xf32>
    %cst_38 = arith.constant dense<0.000000e+00> : vector<8xf32>
    %99 = vector.multi_reduction <add>, %98, %cst_38 [1] : vector<8x8xf32> to vector<8xf32>
    %100 = vector.shape_cast %99 : vector<8xf32> to vector<8x1xf32>
    %101 = arith.truncf %98 : vector<8x8xf32> to vector<8x8xbf16>
    %cst_39 = arith.constant dense<0.000000e+00> : vector<8x8xf32>
    %102 = tpu.matmul %101, %92, %cst_39 {dimension_numbers = #tpu.dot_dimension_numbers<[1], [0], [0], [1], [0, 0, 1, 1], [], []>} : vector<8x8xbf16>, vector<8x8xbf16>, vector<8x8xf32> -> vector<8x8xf32>
    %103 = tpu.reciprocal %100 {approx = true} : vector<8x1xf32> -> vector<8x1xf32>
    %104 = vector.broadcast %103 : vector<8x1xf32> to vector<8x8xf32>
    %105 = arith.mulf %102, %104 : vector<8x8xf32>
    %106 = arith.truncf %105 : vector<8x8xf32> to vector<8x8xbf16>
    %107 = tpu.concatenate %55, %72, %89, %106 in 1 : vector<8x8xbf16>, vector<8x8xbf16>, vector<8x8xbf16>, vector<8x8xbf16> -> vector<8x32xbf16>
    %c0_40 = arith.constant 0 : index
    %c0_41 = arith.constant 0 : index
    %108 = vector.load %arg9[%c0_40, %c0_41] : memref<32x32xbf16, #tpu.memory_space<vmem>>, vector<32x32xbf16>
    %cst_42 = arith.constant dense<0.000000e+00> : vector<8x32xf32>
    %109 = tpu.matmul %107, %108, %cst_42 {dimension_numbers = #tpu.dot_dimension_numbers<[1], [0], [0], [1], [0, 0, 1, 1], [], []>} : vector<8x32xbf16>, vector<32x32xbf16>, vector<8x32xf32> -> vector<8x32xf32>
    %c0_43 = arith.constant 0 : index
    %c0_44 = arith.constant 0 : index
    %110 = vector.load %arg10[%c0_43, %c0_44] : memref<1x32xf32, #tpu.memory_space<vmem>>, vector<1x32xf32>
    %111 = vector.broadcast %110 : vector<1x32xf32> to vector<8x32xf32>
    %112 = arith.addf %109, %111 : vector<8x32xf32>
    %113 = arith.addf %7, %112 : vector<8x32xf32>
    %cst_45 = arith.constant dense<0.000000e+00> : vector<8xf32>
    %114 = vector.multi_reduction <add>, %113, %cst_45 [1] : vector<8x32xf32> to vector<8xf32>
    %115 = vector.shape_cast %114 : vector<8xf32> to vector<8x1xf32>
    %cst_46 = arith.constant 3.200000e+01 : f32
    %116 = vector.broadcast %cst_46 : f32 to vector<8x1xf32>
    %117 = arith.divf %115, %116 : vector<8x1xf32>
    %118 = vector.broadcast %117 : vector<8x1xf32> to vector<8x32xf32>
    %119 = arith.subf %113, %118 : vector<8x32xf32>
    %120 = arith.mulf %119, %119 : vector<8x32xf32>
    %cst_47 = arith.constant dense<0.000000e+00> : vector<8xf32>
    %121 = vector.multi_reduction <add>, %120, %cst_47 [1] : vector<8x32xf32> to vector<8xf32>
    %122 = vector.shape_cast %121 : vector<8xf32> to vector<8x1xf32>
    %cst_48 = arith.constant 3.200000e+01 : f32
    %123 = vector.broadcast %cst_48 : f32 to vector<8x1xf32>
    %124 = arith.divf %122, %123 : vector<8x1xf32>
    %125 = vector.broadcast %117 : vector<8x1xf32> to vector<8x32xf32>
    %126 = arith.subf %113, %125 : vector<8x32xf32>
    %cst_49 = arith.constant 9.99999974E-6 : f32
    %127 = vector.broadcast %cst_49 : f32 to vector<8x1xf32>
    %128 = arith.addf %124, %127 : vector<8x1xf32>
    %129 = math.rsqrt %128 : vector<8x1xf32>
    %130 = vector.broadcast %129 : vector<8x1xf32> to vector<8x32xf32>
    %131 = arith.mulf %126, %130 : vector<8x32xf32>
    %c0_50 = arith.constant 0 : index
    %c0_51 = arith.constant 0 : index
    %132 = vector.load %arg11[%c0_50, %c0_51] : memref<1x32xf32, #tpu.memory_space<vmem>>, vector<1x32xf32>
    %133 = vector.broadcast %132 : vector<1x32xf32> to vector<8x32xf32>
    %134 = arith.mulf %131, %133 : vector<8x32xf32>
    %c0_52 = arith.constant 0 : index
    %c0_53 = arith.constant 0 : index
    %135 = vector.load %arg12[%c0_52, %c0_53] : memref<1x32xf32, #tpu.memory_space<vmem>>, vector<1x32xf32>
    %136 = vector.broadcast %135 : vector<1x32xf32> to vector<8x32xf32>
    %137 = arith.addf %134, %136 : vector<8x32xf32>
    %138 = arith.truncf %137 : vector<8x32xf32> to vector<8x32xbf16>
    %c0_54 = arith.constant 0 : index
    %c0_55 = arith.constant 0 : index
    %139 = vector.load %arg13[%c0_54, %c0_55] : memref<32x128xbf16, #tpu.memory_space<vmem>>, vector<32x128xbf16>
    %cst_56 = arith.constant dense<0.000000e+00> : vector<8x128xf32>
    %140 = tpu.matmul %138, %139, %cst_56 {dimension_numbers = #tpu.dot_dimension_numbers<[1], [0], [0], [1], [0, 0, 1, 1], [], []>} : vector<8x32xbf16>, vector<32x128xbf16>, vector<8x128xf32> -> vector<8x128xf32>
    %c0_57 = arith.constant 0 : index
    %c0_58 = arith.constant 0 : index
    %141 = vector.load %arg14[%c0_57, %c0_58] : memref<1x128xf32, #tpu.memory_space<vmem>>, vector<1x128xf32>
    %142 = vector.broadcast %141 : vector<1x128xf32> to vector<8x128xf32>
    %143 = arith.addf %140, %142 : vector<8x128xf32>
    %cst_59 = arith.constant 5.000000e-01 : f32
    %144 = vector.broadcast %cst_59 : f32 to vector<8x128xf32>
    %145 = arith.mulf %144, %143 : vector<8x128xf32>
    %cst_60 = arith.constant 0.707106769 : f32
    %146 = vector.broadcast %cst_60 : f32 to vector<8x128xf32>
    %147 = arith.mulf %143, %146 : vector<8x128xf32>
    %148 = math.absf %147 : vector<8x128xf32>
    %cst_61 = arith.constant 0.327591091 : f32
    %149 = vector.broadcast %cst_61 : f32 to vector<8x128xf32>
    %150 = arith.mulf %149, %148 : vector<8x128xf32>
    %cst_62 = arith.constant 1.000000e+00 : f32
    %151 = vector.broadcast %cst_62 : f32 to vector<8x128xf32>
    %152 = arith.addf %151, %150 : vector<8x128xf32>
    %cst_63 = arith.constant 1.000000e+00 : f32
    %153 = vector.broadcast %cst_63 : f32 to vector<8x128xf32>
    %154 = arith.divf %153, %152 : vector<8x128xf32>
    %cst_64 = arith.constant 1.06140542 : f32
    %155 = vector.broadcast %cst_64 : f32 to vector<8x128xf32>
    %156 = arith.mulf %155, %154 : vector<8x128xf32>
    %cst_65 = arith.constant -1.45315206 : f32
    %157 = vector.broadcast %cst_65 : f32 to vector<8x128xf32>
    %158 = arith.addf %156, %157 : vector<8x128xf32>
    %159 = arith.mulf %158, %154 : vector<8x128xf32>
    %cst_66 = arith.constant 1.42141378 : f32
    %160 = vector.broadcast %cst_66 : f32 to vector<8x128xf32>
    %161 = arith.addf %159, %160 : vector<8x128xf32>
    %162 = arith.mulf %161, %154 : vector<8x128xf32>
    %cst_67 = arith.constant -0.284496725 : f32
    %163 = vector.broadcast %cst_67 : f32 to vector<8x128xf32>
    %164 = arith.addf %162, %163 : vector<8x128xf32>
    %165 = arith.mulf %164, %154 : vector<8x128xf32>
    %cst_68 = arith.constant 0.254829586 : f32
    %166 = vector.broadcast %cst_68 : f32 to vector<8x128xf32>
    %167 = arith.addf %165, %166 : vector<8x128xf32>
    %168 = arith.mulf %167, %154 : vector<8x128xf32>
    %cst_69 = arith.constant 0.000000e+00 : f32
    %169 = vector.broadcast %cst_69 : f32 to vector<8x128xf32>
    %170 = arith.subf %169, %148 : vector<8x128xf32>
    %171 = arith.mulf %170, %148 : vector<8x128xf32>
    %172 = math.exp %171 : vector<8x128xf32>
    %173 = arith.mulf %168, %172 : vector<8x128xf32>
    %cst_70 = arith.constant 1.000000e+00 : f32
    %174 = vector.broadcast %cst_70 : f32 to vector<8x128xf32>
    %175 = arith.subf %174, %173 : vector<8x128xf32>
    %cst_71 = arith.constant 0.000000e+00 : f32
    %176 = vector.broadcast %cst_71 : f32 to vector<8x128xf32>
    %177 = arith.cmpf olt, %147, %176 : vector<8x128xf32>
    %cst_72 = arith.constant 0.000000e+00 : f32
    %178 = vector.broadcast %cst_72 : f32 to vector<8x128xf32>
    %179 = arith.subf %178, %175 : vector<8x128xf32>
    %180 = arith.select %177, %179, %175 : vector<8x128xi1>, vector<8x128xf32>
    %cst_73 = arith.constant 1.000000e+00 : f32
    %181 = vector.broadcast %cst_73 : f32 to vector<8x128xf32>
    %182 = arith.addf %181, %180 : vector<8x128xf32>
    %183 = arith.mulf %145, %182 : vector<8x128xf32>
    %184 = arith.truncf %183 : vector<8x128xf32> to vector<8x128xbf16>
    %c0_74 = arith.constant 0 : index
    %c0_75 = arith.constant 0 : index
    %185 = vector.load %arg15[%c0_74, %c0_75] : memref<128x32xbf16, #tpu.memory_space<vmem>>, vector<128x32xbf16>
    %cst_76 = arith.constant dense<0.000000e+00> : vector<8x32xf32>
    %186 = tpu.matmul %184, %185, %cst_76 {dimension_numbers = #tpu.dot_dimension_numbers<[1], [0], [0], [1], [0, 0, 1, 1], [], []>} : vector<8x128xbf16>, vector<128x32xbf16>, vector<8x32xf32> -> vector<8x32xf32>
    %c0_77 = arith.constant 0 : index
    %c0_78 = arith.constant 0 : index
    %187 = vector.load %arg16[%c0_77, %c0_78] : memref<1x32xf32, #tpu.memory_space<vmem>>, vector<1x32xf32>
    %188 = vector.broadcast %187 : vector<1x32xf32> to vector<8x32xf32>
    %189 = arith.addf %186, %188 : vector<8x32xf32>
    %190 = arith.addf %113, %189 : vector<8x32xf32>
    %c0_79 = arith.constant 0 : index
    %c0_80 = arith.constant 0 : index
    %c0_81 = arith.constant 0 : index
    %191 = vector.load %arg17[%c0_79, %c0_80, %c0_81] : memref<1x8x32xf32, #tpu.memory_space<vmem>>, vector<1x8x32xf32>
    %192 = vector.shape_cast %191 : vector<1x8x32xf32> to vector<8x32xf32>
    %193 = vector.shape_cast %190 : vector<8x32xf32> to vector<1x8x32xf32>
    tpu.vector_store %arg17[%c0_79, %c0_80, %c0_81], %193 {strides = array<i32>} : memref<1x8x32xf32, #tpu.memory_space<vmem>>, vector<1x8x32xf32>,
    return
  }
  func.func @transform_0(%arg0: i32, %arg1: i32) -> (i32, i32, i32) {
    %c0_i32 = arith.constant 0 : i32
    %c0_i32_0 = arith.constant 0 : i32
    %c0_i32_1 = arith.constant 0 : i32
    return %arg0, %c0_i32, %c0_i32_0 : i32, i32, i32
  }
  func.func @transform_1(%arg0: i32, %arg1: i32) -> (i32, i32) {
    %c0_i32 = arith.constant 0 : i32
    %c0_i32_0 = arith.constant 0 : i32
    %c0_i32_1 = arith.constant 0 : i32
    return %c0_i32, %c0_i32_0 : i32, i32
  }
  func.func @transform_2(%arg0: i32, %arg1: i32) -> (i32, i32) {
    %c0_i32 = arith.constant 0 : i32
    %c0_i32_0 = arith.constant 0 : i32
    %c0_i32_1 = arith.constant 0 : i32
    return %c0_i32, %c0_i32_0 : i32, i32
  }
  func.func @transform_3(%arg0: i32, %arg1: i32) -> (i32, i32) {
    %c0_i32 = arith.constant 0 : i32
    %c0_i32_0 = arith.constant 0 : i32
    %c0_i32_1 = arith.constant 0 : i32
    return %c0_i32, %c0_i32_0 : i32, i32
  }
  func.func @transform_4(%arg0: i32, %arg1: i32) -> (i32, i32) {
    %c0_i32 = arith.constant 0 : i32
    %c0_i32_0 = arith.constant 0 : i32
    %c0_i32_1 = arith.constant 0 : i32
    return %c0_i32, %c0_i32_0 : i32, i32
  }
  func.func @transform_5(%arg0: i32, %arg1: i32) -> (i32, i32) {
    %c0_i32 = arith.constant 0 : i32
    %c0_i32_0 = arith.constant 0 : i32
    %c0_i32_1 = arith.constant 0 : i32
    return %c0_i32, %c0_i32_0 : i32, i32
  }
  func.func @transform_6(%arg0: i32, %arg1: i32) -> (i32, i32) {
    %c0_i32 = arith.constant 0 : i32
    %c0_i32_0 = arith.constant 0 : i32
    %c0_i32_1 = arith.constant 0 : i32
    return %c0_i32, %c0_i32_0 : i32, i32
  }
  func.func @transform_7(%arg0: i32, %arg1: i32) -> (i32, i32) {
    %c0_i32 = arith.constant 0 : i32
    %c0_i32_0 = arith.constant 0 : i32
    %c0_i32_1 = arith.constant 0 : i32
    return %c0_i32, %c0_i32_0 : i32, i32
  }
  func.func @transform_8(%arg0: i32, %arg1: i32) -> (i32, i32) {
    %c0_i32 = arith.constant 0 : i32
    %c0_i32_0 = arith.constant 0 : i32
    %c0_i32_1 = arith.constant 0 : i32
    return %c0_i32, %c0_i32_0 : i32, i32
  }
  func.func @transform_9(%arg0: i32, %arg1: i32) -> (i32, i32) {
    %c0_i32 = arith.constant 0 : i32
    %c0_i32_0 = arith.constant 0 : i32
    %c0_i32_1 = arith.constant 0 : i32
    return %c0_i32, %c0_i32_0 : i32, i32
  }
  func.func @transform_10(%arg0: i32, %arg1: i32) -> (i32, i32) {
    %c0_i32 = arith.constant 0 : i32
    %c0_i32_0 = arith.constant 0 : i32
    %c0_i32_1 = arith.constant 0 : i32
    return %c0_i32, %c0_i32_0 : i32, i32
  }
  func.func @transform_11(%arg0: i32, %arg1: i32) -> (i32, i32) {
    %c0_i32 = arith.constant 0 : i32
    %c0_i32_0 = arith.constant 0 : i32
    %c0_i32_1 = arith.constant 0 : i32
    return %c0_i32, %c0_i32_0 : i32, i32
  }
  func.func @transform_12(%arg0: i32, %arg1: i32) -> (i32, i32) {
    %c0_i32 = arith.constant 0 : i32
    %c0_i32_0 = arith.constant 0 : i32
    %c0_i32_1 = arith.constant 0 : i32
    return %c0_i32, %c0_i32_0 : i32, i32
  }
  func.func @transform_13(%arg0: i32, %arg1: i32) -> (i32, i32) {
    %c0_i32 = arith.constant 0 : i32
    %c0_i32_0 = arith.constant 0 : i32
    %c0_i32_1 = arith.constant 0 : i32
    return %c0_i32, %c0_i32_0 : i32, i32
  }
  func.func @transform_14(%arg0: i32, %arg1: i32) -> (i32, i32) {
    %c0_i32 = arith.constant 0 : i32
    %c0_i32_0 = arith.constant 0 : i32
    %c0_i32_1 = arith.constant 0 : i32
    return %c0_i32, %c0_i32_0 : i32, i32
  }
  func.func @transform_15(%arg0: i32, %arg1: i32) -> (i32, i32, i32) {
    %c0_i32 = arith.constant 0 : i32
    %c0_i32_0 = arith.constant 0 : i32
    return %arg0, %arg1, %c0_i32 : i32, i32, i32
  }
}

</mosaic_0001>

<llo_original>
// kernel: tpu_custom_call.1
$region0: #{tpu_custom_call.1}
  #allocation0 [shape = 'u32[]', space=smem, size = 0x4, offset = 0x4, fixed_abs, tag = 'smem constant byte address 0x4 - core index']
  #allocation1 [shape = 'u32[144,128]{1,0:T(1,128)}', space=vmem, size = 0x12000, scoped, tag = 'internal scratch']
  #allocation2 [shape = 'bf16[8,64]{1,0:T(8,128)(2,1)}', space=vmem, size = 0x800, scoped, tag = 'scratch operand']
  %s0 = inlined_call_operand.vmem [shape: f32[2,8,32], index: 0, kind: input, shape index: {}]
  %s1 = inlined_call_operand.vmem [shape: f32[1,32], index: 1, kind: input, shape index: {}]
  %s2 = inlined_call_operand.vmem [shape: f32[1,32], index: 2, kind: input, shape index: {}]
  %s3 = inlined_call_operand.vmem [shape: bf16[32,32], index: 3, kind: input, shape index: {}]
  %s4 = inlined_call_operand.vmem [shape: f32[1,32], index: 4, kind: input, shape index: {}]
  %s5 = inlined_call_operand.vmem [shape: bf16[32,64], index: 5, kind: input, shape index: {}]
  %s6 = inlined_call_operand.vmem [shape: f32[1,64], index: 6, kind: input, shape index: {}]
  %s7 = inlined_call_operand.vmem [shape: bf16[32,32], index: 7, kind: input, shape index: {}]
  %s8 = inlined_call_operand.vmem [shape: f32[1,32], index: 8, kind: input, shape index: {}]
  %s9 = inlined_call_operand.vmem [shape: f32[1,32], index: 9, kind: input, shape index: {}]
  %s10 = inlined_call_operand.vmem [shape: f32[1,32], index: 10, kind: input, shape index: {}]
  %s11 = inlined_call_operand.vmem [shape: bf16[32,128], index: 11, kind: input, shape index: {}]
  %s12 = inlined_call_operand.hbm [shape: f32[1,128], index: 12, kind: input, shape index: {}]
  %s13 = inlined_call_operand.vmem [shape: bf16[128,32], index: 13, kind: input, shape index: {}]
  %s14 = inlined_call_operand.vmem [shape: f32[1,32], index: 14, kind: input, shape index: {}]
  %s15 = inlined_call_operand.hbm [shape: f32[2,8,32], index: 15, kind: output, shape index: {}]
  %s16 = sld [smem:[#allocation0]]
  $region101: #{tpu_custom_call.1} parent=0
    _
  %s18 = ssub.s32 1, %s16
  %s19 = scalar_select 0, %s18, %s16
  $region1: #{tpu_custom_call.1} parent=0
    #allocation3 [shape = 'u8[512]{0}', space=vmem, size = 0x400, scoped, tag = 'input window, operand 12, single buffered']
    #allocation4 [shape = 's32[2]{0}', space=sflag, size = 0x8, scoped, tag = 'scoped memory for tpu_custom_call.1']
    #allocation5 [shape = 's32[2]{0}', space=sflag, size = 0x8, scoped, tag = 'scoped memory for tpu_custom_call.1']
    #allocation6 [shape = 'u8[8192]{0}', space=vmem, size = 0x2000, scoped, tag = 'output window, operand 0']
    %20 = vsyncpa [#allocation4], 0
    %21 = vsyncpa [#allocation5], 0
    %s22 = scalar_lea.sflag [#allocation5], 1
    %23 = vsyncpa %s22, 0
    loop: start=0, step=1, limit=4
    $region2: #{tpu_custom_call.1} parent=1 // loop_pre_header
      _
    $region3: #{tpu_custom_call.1} parent=1 // loop_header
      %s25 = sphi 0, %s29
      %p26 = scmp.ge.s32.totalorder %s25, 4
      %s32 = sphi 0, %s44
      %s33 = sphi 0, %s40
      %s34 = sphi 0, %s32
      %s35 = sphi 0, %s33
      %s36 = sphi 0, %s34
      %s37 = sphi 0, %s35
      %s47 = sphi 0, %s49
      %s50 = sphi 0, %s47
      %s51 = sphi 0, %s50
      %s67 = sphi 0, %s51
      %s71 = sphi 0, %s71
      %s73 = sphi 0, %s71
      %s74 = sphi 0, %s73
      %s88 = sphi 0, %s74
      %s92 = sphi 0, %s92
      %s94 = sphi 0, %s92
      %s95 = sphi 0, %s94
      %s109 = sphi 0, %s95
      %s113 = sphi 0, %s113
      %s115 = sphi 0, %s113
      %s116 = sphi 0, %s115
      %s130 = sphi 0, %s116
      %s134 = sphi 0, %s134
      %s136 = sphi 0, %s134
      %s137 = sphi 0, %s136
      %s151 = sphi 0, %s137
      %s155 = sphi 0, %s155
      %s157 = sphi 0, %s155
      %s158 = sphi 0, %s157
      %s172 = sphi 0, %s158
      %s176 = sphi 0, %s176
      %s178 = sphi 0, %s176
      %s179 = sphi 0, %s178
      %s193 = sphi 0, %s179
      %s197 = sphi 0, %s197
      %s199 = sphi 0, %s197
      %s200 = sphi 0, %s199
      %s214 = sphi 0, %s200
      %s218 = sphi 0, %s218
      %s220 = sphi 0, %s218
      %s221 = sphi 0, %s220
      %s235 = sphi 0, %s221
      %s239 = sphi 0, %s239
      %s241 = sphi 0, %s239
      %s242 = sphi 0, %s241
      %s256 = sphi 0, %s242
      %s260 = sphi 0, %s260
      %s262 = sphi 0, %s260
      %s263 = sphi 0, %s262
      %s277 = sphi 0, %s263
      %s281 = sphi 0, %s281
      %s283 = sphi 0, %s281
      %s284 = sphi 0, %s283
      %s298 = sphi 0, %s284
      %s302 = sphi 0, %s302
      %s304 = sphi 0, %s302
      %s305 = sphi 0, %s304
      %s319 = sphi 0, %s305
      %s323 = sphi 0, %s323
      %s325 = sphi 0, %s323
      %s326 = sphi 0, %s325
      %s340 = sphi 0, %s326
      %s344 = sphi 0, %s344
      %s346 = sphi 0, %s344
      %s347 = sphi 0, %s346
      %s361 = sphi 0, %s347
      %s369 = sphi 0, %s371
      %s372 = sphi 0, %s369
      %s373 = sphi 0, %s372
      %s389 = sphi 0, %s373
    $region4: #{tpu_custom_call.1} parent=1 // loop_header_branch
      %28 = sbr.rel (%p26) target = $region8
    $region5: #{tpu_custom_call.1} parent=1 // loop_body
      %s30 = ssub.s32 %s25, 1
      %s31 = ssub.s32 %s25, 2
      %s38 = sadd.s32 1, %s33
      %p39 = scmp.ge.s32.totalorder %s38, 1
      %s40 = scalar_select %p39, 0, %s38
      %s41 = sadd.s32 1, %s32
      %s42 = scalar_select %p39, %s41, %s32
      %p43 = scmp.ge.s32.totalorder %s42, 2
      %s44 = scalar_select %p43, 0, %s42
      %s45 = ssub.s32 %s32, %s44
      %p46 = scmp.eq.s32.totalorder %s45, 0
      %s48 = sadd.s32 %s47, 1
      %s49 = scalar_select %p46, %s47, %s48
      %p52 = pneg %p46
      %p53 = scmp.eq.s32.totalorder %s25, 1
      %p54 = por %p52, %p53
      %p55 = scmp.ne.s32.totalorder %s47, %s50
      %p56 = scmp.eq.s32.totalorder %s25, 0
      %p57 = por %p55, %p56
      %p58 = scmp.ne.s32.totalorder %s47, %s50
      %p59 = scmp.eq.s32.totalorder %s30, 1
      %p60 = por %p58, %p59
      %p61 = scmp.ne.s32.totalorder %s50, %s51
      %p62 = scmp.eq.s32.totalorder %s30, 0
      %p63 = por %p61, %p62
      %p64 = scmp.ne.s32.totalorder %s50, %s51
      %p65 = scmp.eq.s32.totalorder %s31, 1
      %p66 = por %p64, %p65
      %p68 = scmp.ne.s32.totalorder %s51, %s67
      %p69 = scmp.eq.s32.totalorder %s31, 0
      %p70 = por %p68, %p69
      %s72 = sadd.s32 %s71, 1
      %p75 = scmp.eq.s32.totalorder %s25, 1
      %p76 = scmp.ne.s32.totalorder %s71, %s73
      %p77 = scmp.eq.s32.totalorder %s25, 0
      %p78 = por %p76, %p77
      %p79 = scmp.ne.s32.totalorder %s71, %s73
      %p80 = scmp.eq.s32.totalorder %s30, 1
      %p81 = por %p79, %p80
      %p82 = scmp.ne.s32.totalorder %s73, %s74
      %p83 = scmp.eq.s32.totalorder %s30, 0
      %p84 = por %p82, %p83
      %p85 = scmp.ne.s32.totalorder %s73, %s74
      %p86 = scmp.eq.s32.totalorder %s31, 1
      %p87 = por %p85, %p86
      %p89 = scmp.ne.s32.totalorder %s74, %s88
      %p90 = scmp.eq.s32.totalorder %s31, 0
      %p91 = por %p89, %p90
      %s93 = sadd.s32 %s92, 1
      %p96 = scmp.eq.s32.totalorder %s25, 1
      %p97 = scmp.ne.s32.totalorder %s92, %s94
      %p98 = scmp.eq.s32.totalorder %s25, 0
      %p99 = por %p97, %p98
      %p100 = scmp.ne.s32.totalorder %s92, %s94
      %p101 = scmp.eq.s32.totalorder %s30, 1
      %p102 = por %p100, %p101
      %p103 = scmp.ne.s32.totalorder %s94, %s95
      %p104 = scmp.eq.s32.totalorder %s30, 0
      %p105 = por %p103, %p104
      %p106 = scmp.ne.s32.totalorder %s94, %s95
      %p107 = scmp.eq.s32.totalorder %s31, 1
      %p108 = por %p106, %p107
      %p110 = scmp.ne.s32.totalorder %s95, %s109
      %p111 = scmp.eq.s32.totalorder %s31, 0
      %p112 = por %p110, %p111
      %s114 = sadd.s32 %s113, 1
      %p117 = scmp.eq.s32.totalorder %s25, 1
      %p118 = scmp.ne.s32.totalorder %s113, %s115
      %p119 = scmp.eq.s32.totalorder %s25, 0
      %p120 = por %p118, %p119
      %p121 = scmp.ne.s32.totalorder %s113, %s115
      %p122 = scmp.eq.s32.totalorder %s30, 1
      %p123 = por %p121, %p122
      %p124 = scmp.ne.s32.totalorder %s115, %s116
      %p125 = scmp.eq.s32.totalorder %s30, 0
      %p126 = por %p124, %p125
      %p127 = scmp.ne.s32.totalorder %s115, %s116
      %p128 = scmp.eq.s32.totalorder %s31, 1
      %p129 = por %p127, %p128
      %p131 = scmp.ne.s32.totalorder %s116, %s130
      %p132 = scmp.eq.s32.totalorder %s31, 0
      %p133 = por %p131, %p132
      %s135 = sadd.s32 %s134, 1
      %p138 = scmp.eq.s32.totalorder %s25, 1
      %p139 = scmp.ne.s32.totalorder %s134, %s136
      %p140 = scmp.eq.s32.totalorder %s25, 0
      %p141 = por %p139, %p140
      %p142 = scmp.ne.s32.totalorder %s134, %s136
      %p143 = scmp.eq.s32.totalorder %s30, 1
      %p144 = por %p142, %p143
      %p145 = scmp.ne.s32.totalorder %s136, %s137
      %p146 = scmp.eq.s32.totalorder %s30, 0
      %p147 = por %p145, %p146
      %p148 = scmp.ne.s32.totalorder %s136, %s137
      %p149 = scmp.eq.s32.totalorder %s31, 1
      %p150 = por %p148, %p149
      %p152 = scmp.ne.s32.totalorder %s137, %s151
      %p153 = scmp.eq.s32.totalorder %s31, 0
      %p154 = por %p152, %p153
      %s156 = sadd.s32 %s155, 1
      %p159 = scmp.eq.s32.totalorder %s25, 1
      %p160 = scmp.ne.s32.totalorder %s155, %s157
      %p161 = scmp.eq.s32.totalorder %s25, 0
      %p162 = por %p160, %p161
      %p163 = scmp.ne.s32.totalorder %s155, %s157
      %p164 = scmp.eq.s32.totalorder %s30, 1
      %p165 = por %p163, %p164
      %p166 = scmp.ne.s32.totalorder %s157, %s158
      %p167 = scmp.eq.s32.totalorder %s30, 0
      %p168 = por %p166, %p167
      %p169 = scmp.ne.s32.totalorder %s157, %s158
      %p170 = scmp.eq.s32.totalorder %s31, 1
      %p171 = por %p169, %p170
      %p173 = scmp.ne.s32.totalorder %s158, %s172
      %p174 = scmp.eq.s32.totalorder %s31, 0
      %p175 = por %p173, %p174
      %s177 = sadd.s32 %s176, 1
      %p180 = scmp.eq.s32.totalorder %s25, 1
      %p181 = scmp.ne.s32.totalorder %s176, %s178
      %p182 = scmp.eq.s32.totalorder %s25, 0
      %p183 = por %p181, %p182
      %p184 = scmp.ne.s32.totalorder %s176, %s178
      %p185 = scmp.eq.s32.totalorder %s30, 1
      %p186 = por %p184, %p185
      %p187 = scmp.ne.s32.totalorder %s178, %s179
      %p188 = scmp.eq.s32.totalorder %s30, 0
      %p189 = por %p187, %p188
      %p190 = scmp.ne.s32.totalorder %s178, %s179
      %p191 = scmp.eq.s32.totalorder %s31, 1
      %p192 = por %p190, %p191
      %p194 = scmp.ne.s32.totalorder %s179, %s193
      %p195 = scmp.eq.s32.totalorder %s31, 0
      %p196 = por %p194, %p195
      %s198 = sadd.s32 %s197, 1
      %p201 = scmp.eq.s32.totalorder %s25, 1
      %p202 = scmp.ne.s32.totalorder %s197, %s199
      %p203 = scmp.eq.s32.totalorder %s25, 0
      %p204 = por %p202, %p203
      %p205 = scmp.ne.s32.totalorder %s197, %s199
      %p206 = scmp.eq.s32.totalorder %s30, 1
      %p207 = por %p205, %p206
      %p208 = scmp.ne.s32.totalorder %s199, %s200
      %p209 = scmp.eq.s32.totalorder %s30, 0
      %p210 = por %p208, %p209
      %p211 = scmp.ne.s32.totalorder %s199, %s200
      %p212 = scmp.eq.s32.totalorder %s31, 1
      %p213 = por %p211, %p212
      %p215 = scmp.ne.s32.totalorder %s200, %s214
      %p216 = scmp.eq.s32.totalorder %s31, 0
      %p217 = por %p215, %p216
      %s219 = sadd.s32 %s218, 1
      %p222 = scmp.eq.s32.totalorder %s25, 1
      %p223 = scmp.ne.s32.totalorder %s218, %s220
      %p224 = scmp.eq.s32.totalorder %s25, 0
      %p225 = por %p223, %p224
      %p226 = scmp.ne.s32.totalorder %s218, %s220
      %p227 = scmp.eq.s32.totalorder %s30, 1
      %p228 = por %p226, %p227
      %p229 = scmp.ne.s32.totalorder %s220, %s221
      %p230 = scmp.eq.s32.totalorder %s30, 0
      %p231 = por %p229, %p230
      %p232 = scmp.ne.s32.totalorder %s220, %s221
      %p233 = scmp.eq.s32.totalorder %s31, 1
      %p234 = por %p232, %p233
      %p236 = scmp.ne.s32.totalorder %s221, %s235
      %p237 = scmp.eq.s32.totalorder %s31, 0
      %p238 = por %p236, %p237
      %s240 = sadd.s32 %s239, 1
      %p243 = scmp.eq.s32.totalorder %s25, 1
      %p244 = scmp.ne.s32.totalorder %s239, %s241
      %p245 = scmp.eq.s32.totalorder %s25, 0
      %p246 = por %p244, %p245
      %p247 = scmp.ne.s32.totalorder %s239, %s241
      %p248 = scmp.eq.s32.totalorder %s30, 1
      %p249 = por %p247, %p248
      %p250 = scmp.ne.s32.totalorder %s241, %s242
      %p251 = scmp.eq.s32.totalorder %s30, 0
      %p252 = por %p250, %p251
      %p253 = scmp.ne.s32.totalorder %s241, %s242
      %p254 = scmp.eq.s32.totalorder %s31, 1
      %p255 = por %p253, %p254
      %p257 = scmp.ne.s32.totalorder %s242, %s256
      %p258 = scmp.eq.s32.totalorder %s31, 0
      %p259 = por %p257, %p258
      %s261 = sadd.s32 %s260, 1
      %p264 = scmp.eq.s32.totalorder %s25, 1
      %p265 = scmp.ne.s32.totalorder %s260, %s262
      %p266 = scmp.eq.s32.totalorder %s25, 0
      %p267 = por %p265, %p266
      %p268 = scmp.ne.s32.totalorder %s260, %s262
      %p269 = scmp.eq.s32.totalorder %s30, 1
      %p270 = por %p268, %p269
      %p271 = scmp.ne.s32.totalorder %s262, %s263
      %p272 = scmp.eq.s32.totalorder %s30, 0
      %p273 = por %p271, %p272
      %p274 = scmp.ne.s32.totalorder %s262, %s263
      %p275 = scmp.eq.s32.totalorder %s31, 1
      %p276 = por %p274, %p275
      %p278 = scmp.ne.s32.totalorder %s263, %s277
      %p279 = scmp.eq.s32.totalorder %s31, 0
      %p280 = por %p278, %p279
      %s282 = sadd.s32 %s281, 1
      %p285 = scmp.eq.s32.totalorder %s25, 1
      %p286 = scmp.ne.s32.totalorder %s281, %s283
      %p287 = scmp.eq.s32.totalorder %s25, 0
      %p288 = por %p286, %p287
      %p289 = scmp.ne.s32.totalorder %s281, %s283
      %p290 = scmp.eq.s32.totalorder %s30, 1
      %p291 = por %p289, %p290
      %p292 = scmp.ne.s32.totalorder %s283, %s284
      %p293 = scmp.eq.s32.totalorder %s30, 0
      %p294 = por %p292, %p293
      %p295 = scmp.ne.s32.totalorder %s283, %s284
      %p296 = scmp.eq.s32.totalorder %s31, 1
      %p297 = por %p295, %p296
      %p299 = scmp.ne.s32.totalorder %s284, %s298
      %p300 = scmp.eq.s32.totalorder %s31, 0
      %p301 = por %p299, %p300
      %s303 = sadd.s32 %s302, 1
      %p306 = scmp.eq.s32.totalorder %s25, 1
      %p307 = scmp.ne.s32.totalorder %s302, %s304
      %p308 = scmp.eq.s32.totalorder %s25, 0
      %p309 = por %p307, %p308
      %p310 = scmp.ne.s32.totalorder %s302, %s304
      %p311 = scmp.eq.s32.totalorder %s30, 1
      %p312 = por %p310, %p311
      %p313 = scmp.ne.s32.totalorder %s304, %s305
      %p314 = scmp.eq.s32.totalorder %s30, 0
      %p315 = por %p313, %p314
      %p316 = scmp.ne.s32.totalorder %s304, %s305
      %p317 = scmp.eq.s32.totalorder %s31, 1
      %p318 = por %p316, %p317
      %p320 = scmp.ne.s32.totalorder %s305, %s319
      %p321 = scmp.eq.s32.totalorder %s31, 0
      %p322 = por %p320, %p321
      %s324 = sadd.s32 %s323, 1
      %p327 = scmp.eq.s32.totalorder %s25, 1
      %p328 = scmp.ne.s32.totalorder %s323, %s325
      %p329 = scmp.eq.s32.totalorder %s25, 0
      %p330 = por %p328, %p329
      %p331 = scmp.ne.s32.totalorder %s323, %s325
      %p332 = scmp.eq.s32.totalorder %s30, 1
      %p333 = por %p331, %p332
      %p334 = scmp.ne.s32.totalorder %s325, %s326
      %p335 = scmp.eq.s32.totalorder %s30, 0
      %p336 = por %p334, %p335
      %p337 = scmp.ne.s32.totalorder %s325, %s326
      %p338 = scmp.eq.s32.totalorder %s31, 1
      %p339 = por %p337, %p338
      %p341 = scmp.ne.s32.totalorder %s326, %s340
      %p342 = scmp.eq.s32.totalorder %s31, 0
      %p343 = por %p341, %p342
      %s345 = sadd.s32 %s344, 1
      %p348 = scmp.eq.s32.totalorder %s25, 1
      %p349 = scmp.ne.s32.totalorder %s344, %s346
      %p350 = scmp.eq.s32.totalorder %s25, 0
      %p351 = por %p349, %p350
      %p352 = scmp.ne.s32.totalorder %s344, %s346
      %p353 = scmp.eq.s32.totalorder %s30, 1
      %p354 = por %p352, %p353
      %p355 = scmp.ne.s32.totalorder %s346, %s347
      %p356 = scmp.eq.s32.totalorder %s30, 0
      %p357 = por %p355, %p356
      %p358 = scmp.ne.s32.totalorder %s346, %s347
      %p359 = scmp.eq.s32.totalorder %s31, 1
      %p360 = por %p358, %p359
      %p362 = scmp.ne.s32.totalorder %s347, %s361
      %p363 = scmp.eq.s32.totalorder %s31, 0
      %p364 = por %p362, %p363
      %s365 = ssub.s32 %s32, %s44
      %s366 = ssub.s32 %s33, %s40
      %s367 = sor.u32 %s365, %s366
      %p368 = scmp.eq.s32.totalorder %s367, 0
      %s370 = sadd.s32 %s369, 1
      %s371 = scalar_select %p368, %s369, %s370
      %p374 = pneg %p368
      %p375 = scmp.eq.s32.totalorder %s25, 1
      %p376 = por %p374, %p375
      %p377 = scmp.ne.s32.totalorder %s369, %s372
      %p378 = scmp.eq.s32.totalorder %s25, 0
      %p379 = por %p377, %p378
      %p380 = scmp.ne.s32.totalorder %s369, %s372
      %p381 = scmp.eq.s32.totalorder %s30, 1
      %p382 = por %p380, %p381
      %p383 = scmp.ne.s32.totalorder %s372, %s373
      %p384 = scmp.eq.s32.totalorder %s30, 0
      %p385 = por %p383, %p384
      %p386 = scmp.ne.s32.totalorder %s372, %s373
      %p387 = scmp.eq.s32.totalorder %s31, 1
      %p388 = por %p386, %p387
      %p390 = scmp.ne.s32.totalorder %s373, %s389
      %p391 = scmp.eq.s32.totalorder %s31, 0
      %p392 = por %p390, %p391
      %p393 = scmp.le.s32.totalorder 1, %s25
      %p394 = scmp.lt.s32.totalorder %s25, 3
      %p395 = pnand %p393, %p394
      %p396 = pneg %p395
      // Predicated region
      $region9: #{tpu_custom_call.1} parent=5 // pred_check
        _
      $region10: #{tpu_custom_call.1} parent=5 // pred_check_branch
        %398 = sbr.rel (%p395) target = $region12
      $region11: #{tpu_custom_call.1} parent=5 // pred_region
        %s399 = ssub.s32 %s25, 1
        // Predicated region
        $region13: #{tpu_custom_call.1} parent=11 // pred_check
          %p400 = pneg %p84
        $region14: #{tpu_custom_call.1} parent=11 // pred_check_branch
          %402 = sbr.rel (%p400) target = $region16
        $region15: #{tpu_custom_call.1} parent=11 // pred_region
          _
        $region16: #{tpu_custom_call.1} parent=11 // pred_fallthru
          _
        // Predicated region
        $region17: #{tpu_custom_call.1} parent=11 // pred_check
          %p403 = pneg %p105
        $region18: #{tpu_custom_call.1} parent=11 // pred_check_branch
          %405 = sbr.rel (%p403) target = $region20
        $region19: #{tpu_custom_call.1} parent=11 // pred_region
          _
        $region20: #{tpu_custom_call.1} parent=11 // pred_fallthru
          _
        // Predicated region
        $region21: #{tpu_custom_call.1} parent=11 // pred_check
          %p406 = pneg %p126
        $region22: #{tpu_custom_call.1} parent=11 // pred_check_branch
          %408 = sbr.rel (%p406) target = $region24
        $region23: #{tpu_custom_call.1} parent=11 // pred_region
          _
        $region24: #{tpu_custom_call.1} parent=11 // pred_fallthru
          _
        // Predicated region
        $region25: #{tpu_custom_call.1} parent=11 // pred_check
          %p409 = pneg %p147
        $region26: #{tpu_custom_call.1} parent=11 // pred_check_branch
          %411 = sbr.rel (%p409) target = $region28
        $region27: #{tpu_custom_call.1} parent=11 // pred_region
          _
        $region28: #{tpu_custom_call.1} parent=11 // pred_fallthru
          _
        // Predicated region
        $region29: #{tpu_custom_call.1} parent=11 // pred_check
          %p412 = pneg %p168
        $region30: #{tpu_custom_call.1} parent=11 // pred_check_branch
          %414 = sbr.rel (%p412) target = $region32
        $region31: #{tpu_custom_call.1} parent=11 // pred_region
          _
        $region32: #{tpu_custom_call.1} parent=11 // pred_fallthru
          _
        // Predicated region
        $region33: #{tpu_custom_call.1} parent=11 // pred_check
          %p415 = pneg %p189
        $region34: #{tpu_custom_call.1} parent=11 // pred_check_branch
          %417 = sbr.rel (%p415) target = $region36
        $region35: #{tpu_custom_call.1} parent=11 // pred_region
          _
        $region36: #{tpu_custom_call.1} parent=11 // pred_fallthru
          _
        // Predicated region
        $region37: #{tpu_custom_call.1} parent=11 // pred_check
          %p418 = pneg %p210
        $region38: #{tpu_custom_call.1} parent=11 // pred_check_branch
          %420 = sbr.rel (%p418) target = $region40
        $region39: #{tpu_custom_call.1} parent=11 // pred_region
          _
        $region40: #{tpu_custom_call.1} parent=11 // pred_fallthru
          _
        // Predicated region
        $region41: #{tpu_custom_call.1} parent=11 // pred_check
          %p421 = pneg %p231
        $region42: #{tpu_custom_call.1} parent=11 // pred_check_branch
          %423 = sbr.rel (%p421) target = $region44
        $region43: #{tpu_custom_call.1} parent=11 // pred_region
          _
        $region44: #{tpu_custom_call.1} parent=11 // pred_fallthru
          _
        // Predicated region
        $region45: #{tpu_custom_call.1} parent=11 // pred_check
          %p424 = pneg %p252
        $region46: #{tpu_custom_call.1} parent=11 // pred_check_branch
          %426 = sbr.rel (%p424) target = $region48
        $region47: #{tpu_custom_call.1} parent=11 // pred_region
          _
        $region48: #{tpu_custom_call.1} parent=11 // pred_fallthru
          _
        // Predicated region
        $region49: #{tpu_custom_call.1} parent=11 // pred_check
          %p427 = pneg %p273
        $region50: #{tpu_custom_call.1} parent=11 // pred_check_branch
          %429 = sbr.rel (%p427) target = $region52
        $region51: #{tpu_custom_call.1} parent=11 // pred_region
          _
        $region52: #{tpu_custom_call.1} parent=11 // pred_fallthru
          _
        // Predicated region
        $region53: #{tpu_custom_call.1} parent=11 // pred_check
          %p430 = pneg %p294
        $region54: #{tpu_custom_call.1} parent=11 // pred_check_branch
          %432 = sbr.rel (%p430) target = $region56
        $region55: #{tpu_custom_call.1} parent=11 // pred_region
          _
        $region56: #{tpu_custom_call.1} parent=11 // pred_fallthru
          _
        // Predicated region
        $region57: #{tpu_custom_call.1} parent=11 // pred_check
          %p433 = pneg %p315
        $region58: #{tpu_custom_call.1} parent=11 // pred_check_branch
          %435 = sbr.rel (%p433) target = $region60
        $region59: #{tpu_custom_call.1} parent=11 // pred_region
          %s437 = ssub.s32 16, 16
          %438 = vsyncadd [#allocation4], %s437
          %s440 = sshll.u32 [#allocation3], 4
          %s441 = int_to_ptr.vmem [resolvable:$true] %s440
          %443 = dma.hbm_to_vmem [thread:$0]  %s12, 16, %s441, [#allocation4]
        $region60: #{tpu_custom_call.1} parent=11 // pred_fallthru
          _
        // Predicated region
        $region61: #{tpu_custom_call.1} parent=11 // pred_check
          %p444 = pneg %p336
        $region62: #{tpu_custom_call.1} parent=11 // pred_check_branch
          %446 = sbr.rel (%p444) target = $region64
        $region63: #{tpu_custom_call.1} parent=11 // pred_region
          _
        $region64: #{tpu_custom_call.1} parent=11 // pred_fallthru
          _
        // Predicated region
        $region65: #{tpu_custom_call.1} parent=11 // pred_check
          %p447 = pneg %p357
        $region66: #{tpu_custom_call.1} parent=11 // pred_check_branch
          %449 = sbr.rel (%p447) target = $region68
        $region67: #{tpu_custom_call.1} parent=11 // pred_region
          _
        $region68: #{tpu_custom_call.1} parent=11 // pred_fallthru
          _
      $region12: #{tpu_custom_call.1} parent=5 // pred_fallthru
        _
      %p450 = scmp.lt.s32.totalorder %s25, 2
      // Predicated region
      $region69: #{tpu_custom_call.1} parent=5 // pred_check
        %p451 = pneg %p450
      $region70: #{tpu_custom_call.1} parent=5 // pred_check_branch
        %453 = sbr.rel (%p451) target = $region72
      $region71: #{tpu_custom_call.1} parent=5 // pred_region
        // Predicated region
        $region73: #{tpu_custom_call.1} parent=71 // pred_check
          %p454 = pneg %p57
        $region74: #{tpu_custom_call.1} parent=71 // pred_check_branch
          %456 = sbr.rel (%p454) target = $region76
        $region75: #{tpu_custom_call.1} parent=71 // pred_region
          %p457 = scmp.lt.s32.totalorder %s32, 1
          %s458 = scalar_select %p457, %s32, 1
          %s459 = smul.addr %s458, 8
          %s460 = scalar_lea.vmem %s0, %s459
        $region76: #{tpu_custom_call.1} parent=71 // pred_fallthru
          _
      $region72: #{tpu_custom_call.1} parent=5 // pred_fallthru
        _
      %p461 = scmp.le.s32.totalorder 1, %s25
      %p462 = scmp.lt.s32.totalorder %s25, 3
      %p463 = pnand %p461, %p462
      %p464 = pneg %p463
      // Predicated region
      $region77: #{tpu_custom_call.1} parent=5 // pred_check
        _
      $region78: #{tpu_custom_call.1} parent=5 // pred_check_branch
        %466 = sbr.rel (%p463) target = $region80
      $region79: #{tpu_custom_call.1} parent=5 // pred_region
        %s467 = ssub.s32 %s25, 1
        // Predicated region
        $region81: #{tpu_custom_call.1} parent=79 // pred_check
          %p468 = pneg %p315
        $region82: #{tpu_custom_call.1} parent=79 // pred_check_branch
          %470 = sbr.rel (%p468) target = $region84
        $region83: #{tpu_custom_call.1} parent=79 // pred_region
          %471 = dma.done [#allocation4], 16
        $region84: #{tpu_custom_call.1} parent=79 // pred_fallthru
          _
        %p472 = scmp.lt.s32.totalorder %s34, 1
        %s473 = scalar_select %p472, %s34, 1
        %s474 = smul.addr %s473, 8
        %s475 = scalar_lea.vmem %s0, %s474
        %p476 = pneg %p63
        %p477 = pneg %p60
        %p478 = pneg %p84
        %p479 = pneg %p81
        %p480 = pneg %p105
        %p481 = pneg %p102
        %p482 = pneg %p126
        %p483 = pneg %p123
        %p484 = pneg %p147
        %p485 = pneg %p144
        %p486 = pneg %p168
        %p487 = pneg %p165
        %p488 = pneg %p189
        %p489 = pneg %p186
        %p490 = pneg %p210
        %p491 = pneg %p207
        %p492 = pneg %p231
        %p493 = pneg %p228
        %p494 = pneg %p252
        %p495 = pneg %p249
        %p496 = pneg %p273
        %p497 = pneg %p270
        %p498 = pneg %p294
        %p499 = pneg %p291
        %p500 = pneg %p315
        %p501 = pneg %p312
        %p502 = pneg %p336
        %p503 = pneg %p333
        %p504 = pneg %p357
        %p505 = pneg %p354
        %p506 = pneg %p385
        %p507 = pneg %p382
        %s508 = sand.u32 %s372, 1
        %s509 = scalar_lea.sflag [#allocation5], %s508
        %s510 = sand.u32 %s372, 1
        %s511 = smul.addr %s510, 8
        %s512 = scalar_lea.vmem [#allocation6], %s511
        %p513 = scmp.lt.s32.totalorder %s34, 1
        %s514 = scalar_select %p513, %s34, 1
        %s515 = smul.addr %s514, 8
        %s516 = scalar_lea.vmem %s0, %s515
        %p518 = scmp.eq.s32.totalorder %s35, 0
        // Predicated region
        $region85: #{tpu_custom_call.1} parent=79 // pred_check
          %p519 = pneg %p518
        $region86: #{tpu_custom_call.1} parent=79 // pred_check_branch
          %521 = sbr.rel (%p519) target = $region88
        $region87: #{tpu_custom_call.1} parent=79 // pred_region
          %v522 = vld [vmem:[%s516] sm:$0xff]
          %vm523 = vcmask 261120
          %v524 = vsel %vm523, %v522, 0.0
          %525 = vadd.xlane.f32.xlu0 %v524
          %v526 = vpop.xlane.xlu0 %525
          %v527 = vrcp.pop 32.0
          %v528 = vmul.f32 %v526, %v527
          %v529 = vsub.f32 %v522, %v528
          %v530 = vmul.f32 %v529, %v529
          %v531 = vsel %vm523, %v530, 0.0
          %532 = vadd.xlane.f32.xlu0 %v531
          %v533 = vpop.xlane.xlu0 %532
          %v534 = vmul.f32 %v533, %v527
          %v535 = vadd.f32 %v534, 1e-05
          %v536 = vrsqrt.pop %v535
          %v537 = vmul.f32 %v529, %v536
          %v538 = vld [vmem:[%s1] sm:$0x1]
          %v540 = vlaneseq
          %v541 = vshrl.u32 %v540, 7
          %v542 = vsub.s32 0, %v541
          %v543 = vrot.slane %v538, %v542
          %v545 = vmul.f32 %v537, %v543
          %v546 = vld [vmem:[%s2] sm:$0x1]
          %v548 = vlaneseq
          %v549 = vshrl.u32 %v548, 7
          %v550 = vsub.s32 0, %v549
          %v551 = vrot.slane %v546, %v550
          %v553 = vadd.f32 %v545, %v551
          %v554 = vpack.c.bf16 %v553, %v553
          %v555 = vld [vmem:[%s5] sm:$0xf]
          %v556 = vld [vmem:[%s5 + $0x4] sm:$0xf]
          %v557 = vld [vmem:[%s5 + $0x8] sm:$0xf]
          %v558 = vld [vmem:[%s5 + $0xc] sm:$0xf]
          %v559 = vld [vmem:[%s6] sm:$0x1]
          %v561 = vlaneseq
          %v562 = vshrl.u32 %v561, 7
          %v563 = vsub.s32 0, %v562
          %v564 = vrot.slane %v559, %v563
          %v570 = vunpack.c.l.b16 %v555
          %v571 = vunpack.c.l.b16 %v556
          %v572 = vunpack.c.l.b16 %v557
          %v573 = vunpack.c.l.b16 %v558
          %v574 = vpack.c.b16 %v571, %v570
          %v575 = vpack.c.b16 %v573, %v572
          %v579 = vsel %vm523, %v554, 0
          %581 = vmatprep.subr.bf16.mxu0 0
          %582 = vmatpush1.bf16.msra.mxu0 0
          %583 = vmatprep.subr.bf16.mxu0 0
          %584 = vmatpush1.bf16.msra.mxu0 0
          %585 = vmatprep.subr.bf16.mxu0 0
          %586 = vmatpush1.bf16.msra.mxu0 0
          %587 = vmatprep.subr.bf16.mxu0 0
          %588 = vmatpush1.bf16.msra.mxu0 0
          %589 = vmatprep.subr.bf16.mxu0 0
          %590 = vmatpush1.bf16.msra.mxu0 0
          %591 = vmatprep.subr.bf16.mxu0 0
          %592 = vmatpush1.bf16.msra.mxu0 0
          %593 = vmatprep.subr.bf16.mxu0 0
          %594 = vmatpush1.bf16.msra.mxu0 %v575
          %595 = vmatprep.subr.bf16.mxu0 0
          %596 = vmatpush1.bf16.msra.mxu0 %v574
          %597 = vmatprep.subr.bf16.mxu0 0
          %598 = vmatpush2.bf16.msra.mxu0 0
          %599 = vmatprep.subr.bf16.mxu0 0
          %600 = vmatpush2.bf16.msra.mxu0 0
          %601 = vmatprep.subr.bf16.mxu0 0
          %602 = vmatpush2.bf16.msra.mxu0 0
          %603 = vmatprep.subr.bf16.mxu0 0
          %604 = vmatpush2.bf16.msra.mxu0 0
          %605 = vmatprep.subr.bf16.mxu0 0
          %606 = vmatpush2.bf16.msra.mxu0 0
          %607 = vmatprep.subr.bf16.mxu0 0
          %608 = vmatpush2.bf16.msra.mxu0 0
          %609 = vmatprep.subr.bf16.mxu0 0
          %610 = vmatpush2.bf16.msra.mxu0 0
          %611 = vmatprep.subr.bf16.mxu0 0
          %612 = vmatpush2.bf16.msra.mxu0 0
          %613 = vmatprep.mubr.bf16.mxu0 0
          %614 = vmatmul.mubr.bf16.gmra.mxu0 %v579
          %v615 = vpop.f32.mrf.mxu0
          %v616 = vadd.f32 %v564, %v615
          %v617 = vpop.f32.mrf.mxu0
          %v618 = vpop.f32.mrf.mxu0
          %v619 = vpop.f32.mrf.mxu0
          %620 = vdwg.mxu0
          %v621 = vpack.c.bf16 %v616, %v616
          %vm622 = vcmask 519168
          %623 = vst.msk [vmem:[#allocation2] sm:$0xf] %vm622, %v621
        $region88: #{tpu_custom_call.1} parent=79 // pred_fallthru
          _
        %s624 = smul.u32 %s35, 8
        %s625 = scalar_lea.vmem %s516, %s624
        %v626 = vld [vmem:[%s625] sm:$0xff]
        %vm627 = vcmask 261120
        %v628 = vsel %vm627, %v626, 0.0
        %629 = vadd.xlane.f32.xlu0 %v628
        %v630 = vpop.xlane.xlu0 %629
        %v631 = vrcp.pop 32.0
        %v632 = vmul.f32 %v630, %v631
        %v633 = vsub.f32 %v626, %v632
        %v634 = vmul.f32 %v633, %v633
        %v635 = vsel %vm627, %v634, 0.0
        %636 = vadd.xlane.f32.xlu0 %v635
        %v637 = vpop.xlane.xlu0 %636
        %v638 = vmul.f32 %v637, %v631
        %v639 = vadd.f32 %v638, 1e-05
        %v640 = vrsqrt.pop %v639
        %v641 = vmul.f32 %v633, %v640
        %v642 = vld [vmem:[%s1] sm:$0x1]
        %v644 = vlaneseq
        %v645 = vshrl.u32 %v644, 7
        %v646 = vsub.s32 0, %v645
        %v647 = vrot.slane %v642, %v646
        %v649 = vmul.f32 %v641, %v647
        %v650 = vld [vmem:[%s2] sm:$0x1]
        %v652 = vlaneseq
        %v653 = vshrl.u32 %v652, 7
        %v654 = vsub.s32 0, %v653
        %v655 = vrot.slane %v650, %v654
        %v657 = vadd.f32 %v649, %v655
        %v658 = vpack.c.bf16 %v657, %v657
        %v659 = vld [vmem:[%s3] sm:$0xf]
        %v660 = vld [vmem:[%s3 + $0x4] sm:$0xf]
        %v661 = vld [vmem:[%s3 + $0x8] sm:$0xf]
        %v662 = vld [vmem:[%s3 + $0xc] sm:$0xf]
        %v663 = vld [vmem:[%s4] sm:$0x1]
        %v665 = vlaneseq
        %v666 = vshrl.u32 %v665, 7
        %v667 = vsub.s32 0, %v666
        %v668 = vrot.slane %v663, %v667
        %v674 = vunpack.c.l.b16 %v659
        %v675 = vunpack.c.l.b16 %v660
        %v676 = vunpack.c.l.b16 %v661
        %v677 = vunpack.c.l.b16 %v662
        %v678 = vpack.c.b16 %v675, %v674
        %v679 = vpack.c.b16 %v677, %v676
        %v683 = vsel %vm627, %v658, 0
        %685 = vmatprep.subr.bf16.mxu0 0
        %686 = vmatpush1.bf16.msra.mxu0 0
        %687 = vmatprep.subr.bf16.mxu0 0
        %688 = vmatpush1.bf16.msra.mxu0 0
        %689 = vmatprep.subr.bf16.mxu0 0
        %690 = vmatpush1.bf16.msra.mxu0 0
        %691 = vmatprep.subr.bf16.mxu0 0
        %692 = vmatpush1.bf16.msra.mxu0 0
        %693 = vmatprep.subr.bf16.mxu0 0
        %694 = vmatpush1.bf16.msra.mxu0 0
        %695 = vmatprep.subr.bf16.mxu0 0
        %696 = vmatpush1.bf16.msra.mxu0 0
        %697 = vmatprep.subr.bf16.mxu0 0
        %698 = vmatpush1.bf16.msra.mxu0 %v679
        %699 = vmatprep.subr.bf16.mxu0 0
        %700 = vmatpush1.bf16.msra.mxu0 %v678
        %701 = vmatprep.subr.bf16.mxu0 0
        %702 = vmatpush2.bf16.msra.mxu0 0
        %703 = vmatprep.subr.bf16.mxu0 0
        %704 = vmatpush2.bf16.msra.mxu0 0
        %705 = vmatprep.subr.bf16.mxu0 0
        %706 = vmatpush2.bf16.msra.mxu0 0
        %707 = vmatprep.subr.bf16.mxu0 0
        %708 = vmatpush2.bf16.msra.mxu0 0
        %709 = vmatprep.subr.bf16.mxu0 0
        %710 = vmatpush2.bf16.msra.mxu0 0
        %711 = vmatprep.subr.bf16.mxu0 0
        %712 = vmatpush2.bf16.msra.mxu0 0
        %713 = vmatprep.subr.bf16.mxu0 0
        %714 = vmatpush2.bf16.msra.mxu0 0
        %715 = vmatprep.subr.bf16.mxu0 0
        %716 = vmatpush2.bf16.msra.mxu0 0
        %717 = vmatprep.mubr.bf16.mxu0 0
        %718 = vmatmul.mubr.bf16.gmra.mxu0 %v683
        %v719 = vpop.f32.mrf.mxu0
        %v720 = vadd.f32 %v668, %v719
        %v721 = vpop.f32.mrf.mxu0
        %v722 = vpop.f32.mrf.mxu0
        %v723 = vpop.f32.mrf.mxu0
        %724 = vdwg.mxu0
        %v725 = vpack.c.bf16 %v720, %v720
        %v726 = vld [vmem:[#allocation2] sm:$0xf]
        %vm727 = vcmask 64512
        %v729 = vsel %vm727, %v725, 0
        %v732 = vsel %vm727, %v726, 0
        %734 = vmatprep.subr.bf16.mxu0 0
        %735 = vmatpush1.bf16.xpose.msra.mxu0 0
        %736 = vmatprep.subr.bf16.mxu0 0
        %737 = vmatpush1.bf16.xpose.msra.mxu0 0
        %738 = vmatprep.subr.bf16.mxu0 0
        %739 = vmatpush1.bf16.xpose.msra.mxu0 0
        %740 = vmatprep.subr.bf16.mxu0 0
        %741 = vmatpush1.bf16.xpose.msra.mxu0 0
        %742 = vmatprep.subr.bf16.mxu0 0
        %743 = vmatpush1.bf16.xpose.msra.mxu0 0
        %744 = vmatprep.subr.bf16.mxu0 0
        %745 = vmatpush1.bf16.xpose.msra.mxu0 0
        %746 = vmatprep.subr.bf16.mxu0 0
        %747 = vmatpush1.bf16.xpose.msra.mxu0 0
        %748 = vmatprep.subr.bf16.mxu0 0
        %749 = vmatpush1.bf16.xpose.msra.mxu0 %v732
        %750 = vmatprep.subr.bf16.mxu0 0
        %751 = vmatpush2.bf16.xpose.msra.mxu0 0
        %752 = vmatprep.subr.bf16.mxu0 0
        %753 = vmatpush2.bf16.xpose.msra.mxu0 0
        %754 = vmatprep.subr.bf16.mxu0 0
        %755 = vmatpush2.bf16.xpose.msra.mxu0 0
        %756 = vmatprep.subr.bf16.mxu0 0
        %757 = vmatpush2.bf16.xpose.msra.mxu0 0
        %758 = vmatprep.subr.bf16.mxu0 0
        %759 = vmatpush2.bf16.xpose.msra.mxu0 0
        %760 = vmatprep.subr.bf16.mxu0 0
        %761 = vmatpush2.bf16.xpose.msra.mxu0 0
        %762 = vmatprep.subr.bf16.mxu0 0
        %763 = vmatpush2.bf16.xpose.msra.mxu0 0
        %764 = vmatprep.subr.bf16.mxu0 0
        %765 = vmatpush2.bf16.xpose.msra.mxu0 0
        %766 = vmatprep.mubr.bf16.mxu0 0
        %767 = vmatmul.mubr.bf16.gmra.mxu0 %v729
        %v768 = vpop.f32.mrf.mxu0
        %v769 = vadd.f32 0.0, %v768
        %v770 = vpop.f32.mrf.mxu0
        %v771 = vpop.f32.mrf.mxu0
        %v772 = vpop.f32.mrf.mxu0
        %773 = vdwg.mxu0
        %v774 = vsel %vm727, %v769, -inf
        %775 = vmax.xlane.f32.xlu0 %v774
        %v776 = vpop.xlane.xlu0 %775
        %v777 = vsub.f32 %v769, %v776
        %v778 = vmul.f32 %v777, 1.442695
        %v779 = vpow.pop %v778
        %v780 = vsel %vm727, %v779, 0.0
        %781 = vadd.xlane.f32.xlu0 %v780
        %v782 = vpop.xlane.xlu0 %781
        %v783 = vpack.c.bf16 %v779, %v779
        %v785 = vunpack.c.l.b16 %v726
        %v786 = vpack.c.b16 %v785, %v785
        %787 = vrot.lane.b32.xlu0 %v786, 96
        %v788 = vpop.permute.xlu0 %787
        %v790 = vsel %vm727, %v783, 0
        %vm792 = vcmask 1043456
        %v794 = vsel %vm792, %v788, 0
        %796 = vmatprep.subr.bf16.mxu0 0
        %797 = vmatpush1.bf16.msra.mxu0 0
        %798 = vmatprep.subr.bf16.mxu0 0
        %799 = vmatpush1.bf16.msra.mxu0 0
        %800 = vmatprep.subr.bf16.mxu0 0
        %801 = vmatpush1.bf16.msra.mxu0 0
        %802 = vmatprep.subr.bf16.mxu0 0
        %803 = vmatpush1.bf16.msra.mxu0 0
        %804 = vmatprep.subr.bf16.mxu0 0
        %805 = vmatpush1.bf16.msra.mxu0 0
        %806 = vmatprep.subr.bf16.mxu0 0
        %807 = vmatpush1.bf16.msra.mxu0 0
        %808 = vmatprep.subr.bf16.mxu0 0
        %809 = vmatpush1.bf16.msra.mxu0 0
        %810 = vmatprep.subr.bf16.mxu0 0
        %811 = vmatpush1.bf16.msra.mxu0 %v794
        %812 = vmatprep.subr.bf16.mxu0 0
        %813 = vmatpush2.bf16.msra.mxu0 0
        %814 = vmatprep.subr.bf16.mxu0 0
        %815 = vmatpush2.bf16.msra.mxu0 0
        %816 = vmatprep.subr.bf16.mxu0 0
        %817 = vmatpush2.bf16.msra.mxu0 0
        %818 = vmatprep.subr.bf16.mxu0 0
        %819 = vmatpush2.bf16.msra.mxu0 0
        %820 = vmatprep.subr.bf16.mxu0 0
        %821 = vmatpush2.bf16.msra.mxu0 0
        %822 = vmatprep.subr.bf16.mxu0 0
        %823 = vmatpush2.bf16.msra.mxu0 0
        %824 = vmatprep.subr.bf16.mxu0 0
        %825 = vmatpush2.bf16.msra.mxu0 0
        %826 = vmatprep.subr.bf16.mxu0 0
        %827 = vmatpush2.bf16.msra.mxu0 0
        %828 = vmatprep.mubr.bf16.mxu0 0
        %829 = vmatmul.mubr.bf16.gmra.mxu0 %v790
        %v830 = vpop.f32.mrf.mxu0
        %v831 = vadd.f32 0.0, %v830
        %v832 = vpop.f32.mrf.mxu0
        %v833 = vpop.f32.mrf.mxu0
        %v834 = vpop.f32.mrf.mxu0
        %835 = vdwg.mxu0
        %v836 = vrcp.pop %v782
        %v837 = vmul.f32 %v831, %v836
        %v838 = vpack.c.bf16 %v837, %v837
        %v839 = vld [vmem:[#allocation2] sm:$0xf]
        %841 = vrot.lane.b32.xlu0 %v725, 120
        %v842 = vpop.permute.xlu0 %841
        %v844 = vunpack.c.l.b16 %v839
        %v845 = vpack.c.b16 %v844, %v844
        %846 = vrot.lane.b32.xlu0 %v845, 120
        %v847 = vpop.permute.xlu0 %846
        %v849 = vsel %vm727, %v842, 0
        %v852 = vsel %vm727, %v847, 0
        %854 = vmatprep.subr.bf16.mxu0 0
        %855 = vmatpush1.bf16.xpose.msra.mxu0 0
        %856 = vmatprep.subr.bf16.mxu0 0
        %857 = vmatpush1.bf16.xpose.msra.mxu0 0
        %858 = vmatprep.subr.bf16.mxu0 0
        %859 = vmatpush1.bf16.xpose.msra.mxu0 0
        %860 = vmatprep.subr.bf16.mxu0 0
        %861 = vmatpush1.bf16.xpose.msra.mxu0 0
        %862 = vmatprep.subr.bf16.mxu0 0
        %863 = vmatpush1.bf16.xpose.msra.mxu0 0
        %864 = vmatprep.subr.bf16.mxu0 0
        %865 = vmatpush1.bf16.xpose.msra.mxu0 0
        %866 = vmatprep.subr.bf16.mxu0 0
        %867 = vmatpush1.bf16.xpose.msra.mxu0 0
        %868 = vmatprep.subr.bf16.mxu0 0
        %869 = vmatpush1.bf16.xpose.msra.mxu0 %v852
        %870 = vmatprep.subr.bf16.mxu0 0
        %871 = vmatpush2.bf16.xpose.msra.mxu0 0
        %872 = vmatprep.subr.bf16.mxu0 0
        %873 = vmatpush2.bf16.xpose.msra.mxu0 0
        %874 = vmatprep.subr.bf16.mxu0 0
        %875 = vmatpush2.bf16.xpose.msra.mxu0 0
        %876 = vmatprep.subr.bf16.mxu0 0
        %877 = vmatpush2.bf16.xpose.msra.mxu0 0
        %878 = vmatprep.subr.bf16.mxu0 0
        %879 = vmatpush2.bf16.xpose.msra.mxu0 0
        %880 = vmatprep.subr.bf16.mxu0 0
        %881 = vmatpush2.bf16.xpose.msra.mxu0 0
        %882 = vmatprep.subr.bf16.mxu0 0
        %883 = vmatpush2.bf16.xpose.msra.mxu0 0
        %884 = vmatprep.subr.bf16.mxu0 0
        %885 = vmatpush2.bf16.xpose.msra.mxu0 0
        %886 = vmatprep.mubr.bf16.mxu0 0
        %887 = vmatmul.mubr.bf16.gmra.mxu0 %v849
        %v888 = vpop.f32.mrf.mxu0
        %v889 = vadd.f32 0.0, %v888
        %v890 = vpop.f32.mrf.mxu0
        %v891 = vpop.f32.mrf.mxu0
        %v892 = vpop.f32.mrf.mxu0
        %893 = vdwg.mxu0
        %v894 = vsel %vm727, %v889, -inf
        %895 = vmax.xlane.f32.xlu0 %v894
        %v896 = vpop.xlane.xlu0 %895
        %v897 = vsub.f32 %v889, %v896
        %v898 = vmul.f32 %v897, 1.442695
        %v899 = vpow.pop %v898
        %v900 = vsel %vm727, %v899, 0.0
        %901 = vadd.xlane.f32.xlu0 %v900
        %v902 = vpop.xlane.xlu0 %901
        %v903 = vpack.c.bf16 %v899, %v899
        %904 = vrot.lane.b32.xlu0 %v845, 88
        %v905 = vpop.permute.xlu0 %904
        %v907 = vsel %vm727, %v903, 0
        %v910 = vsel %vm792, %v905, 0
        %912 = vmatprep.subr.bf16.mxu0 0
        %913 = vmatpush1.bf16.msra.mxu0 0
        %914 = vmatprep.subr.bf16.mxu0 0
        %915 = vmatpush1.bf16.msra.mxu0 0
        %916 = vmatprep.subr.bf16.mxu0 0
        %917 = vmatpush1.bf16.msra.mxu0 0
        %918 = vmatprep.subr.bf16.mxu0 0
        %919 = vmatpush1.bf16.msra.mxu0 0
        %920 = vmatprep.subr.bf16.mxu0 0
        %921 = vmatpush1.bf16.msra.mxu0 0
        %922 = vmatprep.subr.bf16.mxu0 0
        %923 = vmatpush1.bf16.msra.mxu0 0
        %924 = vmatprep.subr.bf16.mxu0 0
        %925 = vmatpush1.bf16.msra.mxu0 0
        %926 = vmatprep.subr.bf16.mxu0 0
        %927 = vmatpush1.bf16.msra.mxu0 %v910
        %928 = vmatprep.subr.bf16.mxu0 0
        %929 = vmatpush2.bf16.msra.mxu0 0
        %930 = vmatprep.subr.bf16.mxu0 0
        %931 = vmatpush2.bf16.msra.mxu0 0
        %932 = vmatprep.subr.bf16.mxu0 0
        %933 = vmatpush2.bf16.msra.mxu0 0
        %934 = vmatprep.subr.bf16.mxu0 0
        %935 = vmatpush2.bf16.msra.mxu0 0
        %936 = vmatprep.subr.bf16.mxu0 0
        %937 = vmatpush2.bf16.msra.mxu0 0
        %938 = vmatprep.subr.bf16.mxu0 0
        %939 = vmatpush2.bf16.msra.mxu0 0
        %940 = vmatprep.subr.bf16.mxu0 0
        %941 = vmatpush2.bf16.msra.mxu0 0
        %942 = vmatprep.subr.bf16.mxu0 0
        %943 = vmatpush2.bf16.msra.mxu0 0
        %944 = vmatprep.mubr.bf16.mxu0 0
        %945 = vmatmul.mubr.bf16.gmra.mxu0 %v907
        %v946 = vpop.f32.mrf.mxu0
        %v947 = vadd.f32 0.0, %v946
        %v948 = vpop.f32.mrf.mxu0
        %v949 = vpop.f32.mrf.mxu0
        %v950 = vpop.f32.mrf.mxu0
        %951 = vdwg.mxu0
        %v952 = vrcp.pop %v902
        %v953 = vmul.f32 %v947, %v952
        %v954 = vpack.c.bf16 %v953, %v953
        %v955 = vld [vmem:[#allocation2] sm:$0xf]
        %956 = vrot.lane.b32.xlu0 %v725, 112
        %v957 = vpop.permute.xlu0 %956
        %v959 = vunpack.c.l.b16 %v955
        %v960 = vpack.c.b16 %v959, %v959
        %961 = vrot.lane.b32.xlu0 %v960, 112
        %v962 = vpop.permute.xlu0 %961
        %v964 = vsel %vm727, %v957, 0
        %v967 = vsel %vm727, %v962, 0
        %969 = vmatprep.subr.bf16.mxu0 0
        %970 = vmatpush1.bf16.xpose.msra.mxu0 0
        %971 = vmatprep.subr.bf16.mxu0 0
        %972 = vmatpush1.bf16.xpose.msra.mxu0 0
        %973 = vmatprep.subr.bf16.mxu0 0
        %974 = vmatpush1.bf16.xpose.msra.mxu0 0
        %975 = vmatprep.subr.bf16.mxu0 0
        %976 = vmatpush1.bf16.xpose.msra.mxu0 0
        %977 = vmatprep.subr.bf16.mxu0 0
        %978 = vmatpush1.bf16.xpose.msra.mxu0 0
        %979 = vmatprep.subr.bf16.mxu0 0
        %980 = vmatpush1.bf16.xpose.msra.mxu0 0
        %981 = vmatprep.subr.bf16.mxu0 0
        %982 = vmatpush1.bf16.xpose.msra.mxu0 0
        %983 = vmatprep.subr.bf16.mxu0 0
        %984 = vmatpush1.bf16.xpose.msra.mxu0 %v967
        %985 = vmatprep.subr.bf16.mxu0 0
        %986 = vmatpush2.bf16.xpose.msra.mxu0 0
        %987 = vmatprep.subr.bf16.mxu0 0
        %988 = vmatpush2.bf16.xpose.msra.mxu0 0
        %989 = vmatprep.subr.bf16.mxu0 0
        %990 = vmatpush2.bf16.xpose.msra.mxu0 0
        %991 = vmatprep.subr.bf16.mxu0 0
        %992 = vmatpush2.bf16.xpose.msra.mxu0 0
        %993 = vmatprep.subr.bf16.mxu0 0
        %994 = vmatpush2.bf16.xpose.msra.mxu0 0
        %995 = vmatprep.subr.bf16.mxu0 0
        %996 = vmatpush2.bf16.xpose.msra.mxu0 0
        %997 = vmatprep.subr.bf16.mxu0 0
        %998 = vmatpush2.bf16.xpose.msra.mxu0 0
        %999 = vmatprep.subr.bf16.mxu0 0
        %1000 = vmatpush2.bf16.xpose.msra.mxu0 0
        %1001 = vmatprep.mubr.bf16.mxu0 0
        %1002 = vmatmul.mubr.bf16.gmra.mxu0 %v964
        %v1003 = vpop.f32.mrf.mxu0
        %v1004 = vadd.f32 0.0, %v1003
        %v1005 = vpop.f32.mrf.mxu0
        %v1006 = vpop.f32.mrf.mxu0
        %v1007 = vpop.f32.mrf.mxu0
        %1008 = vdwg.mxu0
        %v1009 = vsel %vm727, %v1004, -inf
        %1010 = vmax.xlane.f32.xlu0 %v1009
        %v1011 = vpop.xlane.xlu0 %1010
        %v1012 = vsub.f32 %v1004, %v1011
        %v1013 = vmul.f32 %v1012, 1.442695
        %v1014 = vpow.pop %v1013
        %v1015 = vsel %vm727, %v1014, 0.0
        %1016 = vadd.xlane.f32.xlu0 %v1015
        %v1017 = vpop.xlane.xlu0 %1016
        %v1018 = vpack.c.bf16 %v1014, %v1014
        %1019 = vrot.lane.b32.xlu0 %v960, 80
        %v1020 = vpop.permute.xlu0 %1019
        %v1022 = vsel %vm727, %v1018, 0
        %v1025 = vsel %vm792, %v1020, 0
        %1027 = vmatprep.subr.bf16.mxu0 0
        %1028 = vmatpush1.bf16.msra.mxu0 0
        %1029 = vmatprep.subr.bf16.mxu0 0
        %1030 = vmatpush1.bf16.msra.mxu0 0
        %1031 = vmatprep.subr.bf16.mxu0 0
        %1032 = vmatpush1.bf16.msra.mxu0 0
        %1033 = vmatprep.subr.bf16.mxu0 0
        %1034 = vmatpush1.bf16.msra.mxu0 0
        %1035 = vmatprep.subr.bf16.mxu0 0
        %1036 = vmatpush1.bf16.msra.mxu0 0
        %1037 = vmatprep.subr.bf16.mxu0 0
        %1038 = vmatpush1.bf16.msra.mxu0 0
        %1039 = vmatprep.subr.bf16.mxu0 0
        %1040 = vmatpush1.bf16.msra.mxu0 0
        %1041 = vmatprep.subr.bf16.mxu0 0
        %1042 = vmatpush1.bf16.msra.mxu0 %v1025
        %1043 = vmatprep.subr.bf16.mxu0 0
        %1044 = vmatpush2.bf16.msra.mxu0 0
        %1045 = vmatprep.subr.bf16.mxu0 0
        %1046 = vmatpush2.bf16.msra.mxu0 0
        %1047 = vmatprep.subr.bf16.mxu0 0
        %1048 = vmatpush2.bf16.msra.mxu0 0
        %1049 = vmatprep.subr.bf16.mxu0 0
        %1050 = vmatpush2.bf16.msra.mxu0 0
        %1051 = vmatprep.subr.bf16.mxu0 0
        %1052 = vmatpush2.bf16.msra.mxu0 0
        %1053 = vmatprep.subr.bf16.mxu0 0
        %1054 = vmatpush2.bf16.msra.mxu0 0
        %1055 = vmatprep.subr.bf16.mxu0 0
        %1056 = vmatpush2.bf16.msra.mxu0 0
        %1057 = vmatprep.subr.bf16.mxu0 0
        %1058 = vmatpush2.bf16.msra.mxu0 0
        %1059 = vmatprep.mubr.bf16.mxu0 0
        %1060 = vmatmul.mubr.bf16.gmra.mxu0 %v1022
        %v1061 = vpop.f32.mrf.mxu0
        %v1062 = vadd.f32 0.0, %v1061
        %v1063 = vpop.f32.mrf.mxu0
        %v1064 = vpop.f32.mrf.mxu0
        %v1065 = vpop.f32.mrf.mxu0
        %1066 = vdwg.mxu0
        %v1067 = vrcp.pop %v1017
        %v1068 = vmul.f32 %v1062, %v1067
        %v1069 = vpack.c.bf16 %v1068, %v1068
        %v1070 = vld [vmem:[#allocation2] sm:$0xf]
        %1071 = vrot.lane.b32.xlu0 %v725, 104
        %v1072 = vpop.permute.xlu0 %1071
        %v1074 = vunpack.c.l.b16 %v1070
        %v1075 = vpack.c.b16 %v1074, %v1074
        %1076 = vrot.lane.b32.xlu0 %v1075, 104
        %v1077 = vpop.permute.xlu0 %1076
        %v1079 = vsel %vm727, %v1072, 0
        %v1082 = vsel %vm727, %v1077, 0
        %1084 = vmatprep.subr.bf16.mxu0 0
        %1085 = vmatpush1.bf16.xpose.msra.mxu0 0
        %1086 = vmatprep.subr.bf16.mxu0 0
        %1087 = vmatpush1.bf16.xpose.msra.mxu0 0
        %1088 = vmatprep.subr.bf16.mxu0 0
        %1089 = vmatpush1.bf16.xpose.msra.mxu0 0
        %1090 = vmatprep.subr.bf16.mxu0 0
        %1091 = vmatpush1.bf16.xpose.msra.mxu0 0
        %1092 = vmatprep.subr.bf16.mxu0 0
        %1093 = vmatpush1.bf16.xpose.msra.mxu0 0
        %1094 = vmatprep.subr.bf16.mxu0 0
        %1095 = vmatpush1.bf16.xpose.msra.mxu0 0
        %1096 = vmatprep.subr.bf16.mxu0 0
        %1097 = vmatpush1.bf16.xpose.msra.mxu0 0
        %1098 = vmatprep.subr.bf16.mxu0 0
        %1099 = vmatpush1.bf16.xpose.msra.mxu0 %v1082
        %1100 = vmatprep.subr.bf16.mxu0 0
        %1101 = vmatpush2.bf16.xpose.msra.mxu0 0
        %1102 = vmatprep.subr.bf16.mxu0 0
        %1103 = vmatpush2.bf16.xpose.msra.mxu0 0
        %1104 = vmatprep.subr.bf16.mxu0 0
        %1105 = vmatpush2.bf16.xpose.msra.mxu0 0
        %1106 = vmatprep.subr.bf16.mxu0 0
        %1107 = vmatpush2.bf16.xpose.msra.mxu0 0
        %1108 = vmatprep.subr.bf16.mxu0 0
        %1109 = vmatpush2.bf16.xpose.msra.mxu0 0
        %1110 = vmatprep.subr.bf16.mxu0 0
        %1111 = vmatpush2.bf16.xpose.msra.mxu0 0
        %1112 = vmatprep.subr.bf16.mxu0 0
        %1113 = vmatpush2.bf16.xpose.msra.mxu0 0
        %1114 = vmatprep.subr.bf16.mxu0 0
        %1115 = vmatpush2.bf16.xpose.msra.mxu0 0
        %1116 = vmatprep.mubr.bf16.mxu0 0
        %1117 = vmatmul.mubr.bf16.gmra.mxu0 %v1079
        %v1118 = vpop.f32.mrf.mxu0
        %v1119 = vadd.f32 0.0, %v1118
        %v1120 = vpop.f32.mrf.mxu0
        %v1121 = vpop.f32.mrf.mxu0
        %v1122 = vpop.f32.mrf.mxu0
        %1123 = vdwg.mxu0
        %v1124 = vsel %vm727, %v1119, -inf
        %1125 = vmax.xlane.f32.xlu0 %v1124
        %v1126 = vpop.xlane.xlu0 %1125
        %v1127 = vsub.f32 %v1119, %v1126
        %v1128 = vmul.f32 %v1127, 1.442695
        %v1129 = vpow.pop %v1128
        %v1130 = vsel %vm727, %v1129, 0.0
        %1131 = vadd.xlane.f32.xlu0 %v1130
        %v1132 = vpop.xlane.xlu0 %1131
        %v1133 = vpack.c.bf16 %v1129, %v1129
        %1134 = vrot.lane.b32.xlu0 %v1075, 72
        %v1135 = vpop.permute.xlu0 %1134
        %v1137 = vsel %vm727, %v1133, 0
        %v1140 = vsel %vm792, %v1135, 0
        %1142 = vmatprep.subr.bf16.mxu0 0
        %1143 = vmatpush1.bf16.msra.mxu0 0
        %1144 = vmatprep.subr.bf16.mxu0 0
        %1145 = vmatpush1.bf16.msra.mxu0 0
        %1146 = vmatprep.subr.bf16.mxu0 0
        %1147 = vmatpush1.bf16.msra.mxu0 0
        %1148 = vmatprep.subr.bf16.mxu0 0
        %1149 = vmatpush1.bf16.msra.mxu0 0
        %1150 = vmatprep.subr.bf16.mxu0 0
        %1151 = vmatpush1.bf16.msra.mxu0 0
        %1152 = vmatprep.subr.bf16.mxu0 0
        %1153 = vmatpush1.bf16.msra.mxu0 0
        %1154 = vmatprep.subr.bf16.mxu0 0
        %1155 = vmatpush1.bf16.msra.mxu0 0
        %1156 = vmatprep.subr.bf16.mxu0 0
        %1157 = vmatpush1.bf16.msra.mxu0 %v1140
        %1158 = vmatprep.subr.bf16.mxu0 0
        %1159 = vmatpush2.bf16.msra.mxu0 0
        %1160 = vmatprep.subr.bf16.mxu0 0
        %1161 = vmatpush2.bf16.msra.mxu0 0
        %1162 = vmatprep.subr.bf16.mxu0 0
        %1163 = vmatpush2.bf16.msra.mxu0 0
        %1164 = vmatprep.subr.bf16.mxu0 0
        %1165 = vmatpush2.bf16.msra.mxu0 0
        %1166 = vmatprep.subr.bf16.mxu0 0
        %1167 = vmatpush2.bf16.msra.mxu0 0
        %1168 = vmatprep.subr.bf16.mxu0 0
        %1169 = vmatpush2.bf16.msra.mxu0 0
        %1170 = vmatprep.subr.bf16.mxu0 0
        %1171 = vmatpush2.bf16.msra.mxu0 0
        %1172 = vmatprep.subr.bf16.mxu0 0
        %1173 = vmatpush2.bf16.msra.mxu0 0
        %1174 = vmatprep.mubr.bf16.mxu0 0
        %1175 = vmatmul.mubr.bf16.gmra.mxu0 %v1137
        %v1176 = vpop.f32.mrf.mxu0
        %v1177 = vadd.f32 0.0, %v1176
        %v1178 = vpop.f32.mrf.mxu0
        %v1179 = vpop.f32.mrf.mxu0
        %v1180 = vpop.f32.mrf.mxu0
        %1181 = vdwg.mxu0
        %v1182 = vrcp.pop %v1132
        %v1183 = vmul.f32 %v1177, %v1182
        %v1184 = vpack.c.bf16 %v1183, %v1183
        %1186 = vrot.lane.b32.xlu0 %v954, 8
        %v1187 = vpop.permute.xlu0 %1186
        %1189 = vrot.lane.b32.xlu0 %v1069, 16
        %v1190 = vpop.permute.xlu0 %1189
        %1192 = vrot.lane.b32.xlu0 %v1184, 24
        %v1193 = vpop.permute.xlu0 %1192
        %v1196 = vsel %vm727, %v838, %v1187
        %vm1197 = vcmask 130048
        %v1199 = vsel %vm1197, %v1196, %v1190
        %vm1200 = vcmask 195584
        %v1202 = vsel %vm1200, %v1199, %v1193
        %v1203 = vld [vmem:[%s7] sm:$0xf]
        %v1204 = vld [vmem:[%s7 + $0x4] sm:$0xf]
        %v1205 = vld [vmem:[%s7 + $0x8] sm:$0xf]
        %v1206 = vld [vmem:[%s7 + $0xc] sm:$0xf]
        %v1207 = vld [vmem:[%s8] sm:$0x1]
        %v1209 = vlaneseq
        %v1210 = vshrl.u32 %v1209, 7
        %v1211 = vsub.s32 0, %v1210
        %v1212 = vrot.slane %v1207, %v1211
        %v1218 = vunpack.c.l.b16 %v1203
        %v1219 = vunpack.c.l.b16 %v1204
        %v1220 = vunpack.c.l.b16 %v1205
        %v1221 = vunpack.c.l.b16 %v1206
        %v1222 = vpack.c.b16 %v1219, %v1218
        %v1223 = vpack.c.b16 %v1221, %v1220
        %v1226 = vsel %vm627, %v1202, 0
        %1228 = vmatprep.subr.bf16.mxu0 0
        %1229 = vmatpush1.bf16.msra.mxu0 0
        %1230 = vmatprep.subr.bf16.mxu0 0
        %1231 = vmatpush1.bf16.msra.mxu0 0
        %1232 = vmatprep.subr.bf16.mxu0 0
        %1233 = vmatpush1.bf16.msra.mxu0 0
        %1234 = vmatprep.subr.bf16.mxu0 0
        %1235 = vmatpush1.bf16.msra.mxu0 0
        %1236 = vmatprep.subr.bf16.mxu0 0
        %1237 = vmatpush1.bf16.msra.mxu0 0
        %1238 = vmatprep.subr.bf16.mxu0 0
        %1239 = vmatpush1.bf16.msra.mxu0 0
        %1240 = vmatprep.subr.bf16.mxu0 0
        %1241 = vmatpush1.bf16.msra.mxu0 %v1223
        %1242 = vmatprep.subr.bf16.mxu0 0
        %1243 = vmatpush1.bf16.msra.mxu0 %v1222
        %1244 = vmatprep.subr.bf16.mxu0 0
        %1245 = vmatpush2.bf16.msra.mxu0 0
        %1246 = vmatprep.subr.bf16.mxu0 0
        %1247 = vmatpush2.bf16.msra.mxu0 0
        %1248 = vmatprep.subr.bf16.mxu0 0
        %1249 = vmatpush2.bf16.msra.mxu0 0
        %1250 = vmatprep.subr.bf16.mxu0 0
        %1251 = vmatpush2.bf16.msra.mxu0 0
        %1252 = vmatprep.subr.bf16.mxu0 0
        %1253 = vmatpush2.bf16.msra.mxu0 0
        %1254 = vmatprep.subr.bf16.mxu0 0
        %1255 = vmatpush2.bf16.msra.mxu0 0
        %1256 = vmatprep.subr.bf16.mxu0 0
        %1257 = vmatpush2.bf16.msra.mxu0 0
        %1258 = vmatprep.subr.bf16.mxu0 0
        %1259 = vmatpush2.bf16.msra.mxu0 0
        %1260 = vmatprep.mubr.bf16.mxu0 0
        %1261 = vmatmul.mubr.bf16.gmra.mxu0 %v1226
        %v1262 = vpop.f32.mrf.mxu0
        %v1263 = vadd.f32 %v1212, %v1262
        %v1264 = vpop.f32.mrf.mxu0
        %v1265 = vpop.f32.mrf.mxu0
        %v1266 = vpop.f32.mrf.mxu0
        %1267 = vdwg.mxu0
        %v1268 = vadd.f32 %v626, %v1263
        %v1269 = vsel %vm627, %v1268, 0.0
        %1270 = vadd.xlane.f32.xlu0 %v1269
        %v1271 = vpop.xlane.xlu0 %1270
        %v1272 = vmul.f32 %v1271, %v631
        %v1273 = vsub.f32 %v1268, %v1272
        %v1274 = vmul.f32 %v1273, %v1273
        %v1275 = vsel %vm627, %v1274, 0.0
        %1276 = vadd.xlane.f32.xlu0 %v1275
        %v1277 = vpop.xlane.xlu0 %1276
        %v1278 = vmul.f32 %v1277, %v631
        %v1279 = vadd.f32 %v1278, 1e-05
        %v1280 = vrsqrt.pop %v1279
        %v1281 = vmul.f32 %v1273, %v1280
        %v1282 = vld [vmem:[%s9] sm:$0x1]
        %v1284 = vlaneseq
        %v1285 = vshrl.u32 %v1284, 7
        %v1286 = vsub.s32 0, %v1285
        %v1287 = vrot.slane %v1282, %v1286
        %v1289 = vmul.f32 %v1281, %v1287
        %v1290 = vld [vmem:[%s10] sm:$0x1]
        %v1292 = vlaneseq
        %v1293 = vshrl.u32 %v1292, 7
        %v1294 = vsub.s32 0, %v1293
        %v1295 = vrot.slane %v1290, %v1294
        %v1297 = vadd.f32 %v1289, %v1295
        %v1298 = vpack.c.bf16 %v1297, %v1297
        %v1299 = vld [vmem:[%s11] sm:$0xf]
        %v1300 = vld [vmem:[%s11 + $0x4] sm:$0xf]
        %v1301 = vld [vmem:[%s11 + $0x8] sm:$0xf]
        %v1302 = vld [vmem:[%s11 + $0xc] sm:$0xf]
        %v1303 = vld [vmem:[#allocation3] sm:$0x1]
        %v1305 = vlaneseq
        %v1306 = vshrl.u32 %v1305, 7
        %v1307 = vsub.s32 0, %v1306
        %v1308 = vrot.slane %v1303, %v1307
        %v1314 = vunpack.c.l.b16 %v1299
        %v1315 = vunpack.c.l.b16 %v1300
        %v1316 = vunpack.c.l.b16 %v1301
        %v1317 = vunpack.c.l.b16 %v1302
        %v1318 = vpack.c.b16 %v1315, %v1314
        %v1319 = vpack.c.b16 %v1317, %v1316
        %v1323 = vsel %vm627, %v1298, 0
        %1325 = vmatprep.subr.bf16.mxu0 0
        %1326 = vmatpush1.bf16.msra.mxu0 0
        %1327 = vmatprep.subr.bf16.mxu0 0
        %1328 = vmatpush1.bf16.msra.mxu0 0
        %1329 = vmatprep.subr.bf16.mxu0 0
        %1330 = vmatpush1.bf16.msra.mxu0 0
        %1331 = vmatprep.subr.bf16.mxu0 0
        %1332 = vmatpush1.bf16.msra.mxu0 0
        %1333 = vmatprep.subr.bf16.mxu0 0
        %1334 = vmatpush1.bf16.msra.mxu0 0
        %1335 = vmatprep.subr.bf16.mxu0 0
        %1336 = vmatpush1.bf16.msra.mxu0 0
        %1337 = vmatprep.subr.bf16.mxu0 0
        %1338 = vmatpush1.bf16.msra.mxu0 %v1319
        %1339 = vmatprep.subr.bf16.mxu0 0
        %1340 = vmatpush1.bf16.msra.mxu0 %v1318
        %1341 = vmatprep.subr.bf16.mxu0 0
        %1342 = vmatpush2.bf16.msra.mxu0 0
        %1343 = vmatprep.subr.bf16.mxu0 0
        %1344 = vmatpush2.bf16.msra.mxu0 0
        %1345 = vmatprep.subr.bf16.mxu0 0
        %1346 = vmatpush2.bf16.msra.mxu0 0
        %1347 = vmatprep.subr.bf16.mxu0 0
        %1348 = vmatpush2.bf16.msra.mxu0 0
        %1349 = vmatprep.subr.bf16.mxu0 0
        %1350 = vmatpush2.bf16.msra.mxu0 0
        %1351 = vmatprep.subr.bf16.mxu0 0
        %1352 = vmatpush2.bf16.msra.mxu0 0
        %1353 = vmatprep.subr.bf16.mxu0 0
        %1354 = vmatpush2.bf16.msra.mxu0 0
        %1355 = vmatprep.subr.bf16.mxu0 0
        %1356 = vmatpush2.bf16.msra.mxu0 0
        %1357 = vmatprep.mubr.bf16.mxu0 0
        %1358 = vmatmul.mubr.bf16.gmra.mxu0 %v1323
        %v1359 = vpop.f32.mrf.mxu0
        %v1360 = vadd.f32 %v1308, %v1359
        %v1361 = vpop.f32.mrf.mxu0
        %v1362 = vpop.f32.mrf.mxu0
        %v1363 = vpop.f32.mrf.mxu0
        %1364 = vdwg.mxu0
        %v1365 = vmul.f32 %v1360, 0.5
        %v1366 = vmul.f32 %v1360, 0.70710677
        %v1367 = vand.u32 2147483647, %v1366
        %v1368 = vmul.f32 %v1367, 0.3275911
        %v1369 = vadd.f32 %v1368, 1.0
        %v1370 = vrcp.pop %v1369
        %v1371 = vmul.f32 1.0, %v1370
        %v1372 = vmul.f32 %v1371, 1.0614054
        %v1373 = vadd.f32 %v1372, -1.4531521
        %v1374 = vmul.f32 %v1373, %v1371
        %v1375 = vadd.f32 %v1374, 1.4214138
        %v1376 = vmul.f32 %v1375, %v1371
        %v1377 = vadd.f32 %v1376, -0.28449672
        %v1378 = vmul.f32 %v1377, %v1371
        %v1379 = vadd.f32 %v1378, 0.2548296
        %v1380 = vmul.f32 %v1379, %v1371
        %v1381 = vsub.f32 0.0, %v1367
        %v1382 = vmul.f32 %v1381, %v1367
        %v1383 = vmul.f32 %v1382, 1.442695
        %v1384 = vpow.pop %v1383
        %v1385 = vmul.f32 %v1380, %v1384
        %v1386 = vsub.f32 1.0, %v1385
        %vm1387 = vcmp.lt.f32.partialorder %v1366, 0.0
        %v1388 = vsub.f32 0.0, %v1386
        %v1389 = vsel %vm1387, %v1388, %v1386
        %v1390 = vadd.f32 %v1389, 1.0
        %v1391 = vmul.f32 %v1365, %v1390
        %v1392 = vpack.c.bf16 %v1391, %v1391
        %v1393 = vld [vmem:[%s13] sm:$0xf]
        %v1394 = vld [vmem:[%s13 + $0x4] sm:$0xf]
        %v1395 = vld [vmem:[%s13 + $0x8] sm:$0xf]
        %v1396 = vld [vmem:[%s13 + $0xc] sm:$0xf]
        %v1397 = vld [vmem:[%s13 + $0x10] sm:$0xf]
        %v1398 = vld [vmem:[%s13 + $0x14] sm:$0xf]
        %v1399 = vld [vmem:[%s13 + $0x18] sm:$0xf]
        %v1400 = vld [vmem:[%s13 + $0x1c] sm:$0xf]
        %v1401 = vld [vmem:[%s13 + $0x20] sm:$0xf]
        %v1402 = vld [vmem:[%s13 + $0x24] sm:$0xf]
        %v1403 = vld [vmem:[%s13 + $0x28] sm:$0xf]
        %v1404 = vld [vmem:[%s13 + $0x2c] sm:$0xf]
        %v1405 = vld [vmem:[%s13 + $0x30] sm:$0xf]
        %v1406 = vld [vmem:[%s13 + $0x34] sm:$0xf]
        %v1407 = vld [vmem:[%s13 + $0x38] sm:$0xf]
        %v1408 = vld [vmem:[%s13 + $0x3c] sm:$0xf]
        %v1409 = vld [vmem:[%s14] sm:$0x1]
        %v1411 = vlaneseq
        %v1412 = vshrl.u32 %v1411, 7
        %v1413 = vsub.s32 0, %v1412
        %v1414 = vrot.slane %v1409, %v1413
        %v1432 = vunpack.c.l.b16 %v1393
        %v1433 = vunpack.c.l.b16 %v1394
        %v1434 = vunpack.c.l.b16 %v1395
        %v1435 = vunpack.c.l.b16 %v1396
        %v1436 = vunpack.c.l.b16 %v1397
        %v1437 = vunpack.c.l.b16 %v1398
        %v1438 = vunpack.c.l.b16 %v1399
        %v1439 = vunpack.c.l.b16 %v1400
        %v1440 = vunpack.c.l.b16 %v1401
        %v1441 = vunpack.c.l.b16 %v1402
        %v1442 = vunpack.c.l.b16 %v1403
        %v1443 = vunpack.c.l.b16 %v1404
        %v1444 = vunpack.c.l.b16 %v1405
        %v1445 = vunpack.c.l.b16 %v1406
        %v1446 = vunpack.c.l.b16 %v1407
        %v1447 = vunpack.c.l.b16 %v1408
        %v1448 = vpack.c.b16 %v1433, %v1432
        %v1449 = vpack.c.b16 %v1435, %v1434
        %v1450 = vpack.c.b16 %v1437, %v1436
        %v1451 = vpack.c.b16 %v1439, %v1438
        %v1452 = vpack.c.b16 %v1441, %v1440
        %v1453 = vpack.c.b16 %v1443, %v1442
        %v1454 = vpack.c.b16 %v1445, %v1444
        %v1455 = vpack.c.b16 %v1447, %v1446
        %1464 = vmatprep.subr.bf16.mxu0 0
        %1465 = vmatpush1.bf16.msra.mxu0 %v1455
        %1466 = vmatprep.subr.bf16.mxu0 0
        %1467 = vmatpush1.bf16.msra.mxu0 %v1454
        %1468 = vmatprep.subr.bf16.mxu0 0
        %1469 = vmatpush1.bf16.msra.mxu0 %v1453
        %1470 = vmatprep.subr.bf16.mxu0 0
        %1471 = vmatpush1.bf16.msra.mxu0 %v1452
        %1472 = vmatprep.subr.bf16.mxu0 0
        %1473 = vmatpush1.bf16.msra.mxu0 %v1451
        %1474 = vmatprep.subr.bf16.mxu0 0
        %1475 = vmatpush1.bf16.msra.mxu0 %v1450
        %1476 = vmatprep.subr.bf16.mxu0 0
        %1477 = vmatpush1.bf16.msra.mxu0 %v1449
        %1478 = vmatprep.subr.bf16.mxu0 0
        %1479 = vmatpush1.bf16.msra.mxu0 %v1448
        %1480 = vmatprep.subr.bf16.mxu0 0
        %1481 = vmatpush2.bf16.msra.mxu0 0
        %1482 = vmatprep.subr.bf16.mxu0 0
        %1483 = vmatpush2.bf16.msra.mxu0 0
        %1484 = vmatprep.subr.bf16.mxu0 0
        %1485 = vmatpush2.bf16.msra.mxu0 0
        %1486 = vmatprep.subr.bf16.mxu0 0
        %1487 = vmatpush2.bf16.msra.mxu0 0
        %1488 = vmatprep.subr.bf16.mxu0 0
        %1489 = vmatpush2.bf16.msra.mxu0 0
        %1490 = vmatprep.subr.bf16.mxu0 0
        %1491 = vmatpush2.bf16.msra.mxu0 0
        %1492 = vmatprep.subr.bf16.mxu0 0
        %1493 = vmatpush2.bf16.msra.mxu0 0
        %1494 = vmatprep.subr.bf16.mxu0 0
        %1495 = vmatpush2.bf16.msra.mxu0 0
        %1496 = vmatprep.mubr.bf16.mxu0 0
        %1497 = vmatmul.mubr.bf16.gmra.mxu0 %v1392
        %v1498 = vpop.f32.mrf.mxu0
        %v1499 = vadd.f32 %v1414, %v1498
        %v1500 = vpop.f32.mrf.mxu0
        %v1501 = vpop.f32.mrf.mxu0
        %v1502 = vpop.f32.mrf.mxu0
        %1503 = vdwg.mxu0
        %v1504 = vadd.f32 %v1268, %v1499
        %1505 = vst.msk [vmem:[%s512] sm:$0xff] %vm627, %v1504
        %s1506 = sand.u32 %s372, 1
        %s1507 = scalar_lea.sflag [#allocation5], %s1506
        %s1508 = sand.u32 %s372, 1
        %s1509 = smul.addr %s1508, 8
        %s1510 = scalar_lea.vmem [#allocation6], %s1509
        // Predicated region
        $region89: #{tpu_custom_call.1} parent=79 // pred_check
          %p1511 = pneg %p382
        $region90: #{tpu_custom_call.1} parent=79 // pred_check_branch
          %1513 = sbr.rel (%p1511) target = $region92
        $region91: #{tpu_custom_call.1} parent=79 // pred_region
          %s1515 = ssub.s32 128, 128
          %1516 = vsyncadd %s1507, %s1515
          %s1517 = sadd.s32 %s35, %s34
          %s1518 = smul.addr %s1517, 128
          %s1519 = scalar_lea.hbm %s15, %s1518
          %s1521 = sshll.u32 %s1510, 4
          %s1522 = int_to_ptr.vmem [resolvable:$true] %s1521
          %1524 = dma.vmem_to_hbm [thread:$0]  %s1522, 128, %s1519, %s1507
        $region92: #{tpu_custom_call.1} parent=79 // pred_fallthru
          _
      $region80: #{tpu_custom_call.1} parent=5 // pred_fallthru
        _
      %p1525 = scmp.le.s32.totalorder 2, %s25
      // Predicated region
      $region93: #{tpu_custom_call.1} parent=5 // pred_check
        %p1526 = pneg %p1525
      $region94: #{tpu_custom_call.1} parent=5 // pred_check_branch
        %1528 = sbr.rel (%p1526) target = $region96
      $region95: #{tpu_custom_call.1} parent=5 // pred_region
        %s1529 = ssub.s32 %s25, 2
        // Predicated region
        $region97: #{tpu_custom_call.1} parent=95 // pred_check
          %p1530 = pneg %p388
        $region98: #{tpu_custom_call.1} parent=95 // pred_check_branch
          %1532 = sbr.rel (%p1530) target = $region100
        $region99: #{tpu_custom_call.1} parent=95 // pred_region
          %s1533 = sand.u32 %s373, 1
          %s1534 = scalar_lea.sflag [#allocation5], %s1533
          %s1535 = sand.u32 %s373, 1
          %s1536 = smul.addr %s1535, 8
          %s1537 = scalar_lea.vmem [#allocation6], %s1536
          %1538 = dma.done %s1534, 128
        $region100: #{tpu_custom_call.1} parent=95 // pred_fallthru
          _
      $region96: #{tpu_custom_call.1} parent=5 // pred_fallthru
        _
    $region6: #{tpu_custom_call.1} parent=1 // loop_footer
      %s29 = sadd.s32 1, %s25
    $region7: #{tpu_custom_call.1} parent=1 // loop_footer_branch
      %24 = sbr.rel target = $region3
    $region8: #{tpu_custom_call.1} parent=1 // loop_exit
      _
    %1539 = vsyncpa [#allocation4], 1
    %s1540 = scalar_lea.sflag [#allocation4], 1
    %1541 = vsyncpa %s1540, 1
    %1542 = vsyncpa [#allocation5], 1
    %s1543 = scalar_lea.sflag [#allocation5], 1
    %1544 = vsyncpa %s1543, 1

</llo_original>
